<compile_context>
chip_gen: v7x
topology: tpu7x:2x2x1
jax: 0.10.0
libtpu: 0.0.40
codegen_flags: <defaults>
</compile_context>

<pallas_src>
import jax
import jax.numpy as jnp
from jax.experimental import pallas as pl
from jax.experimental.pallas import tpu as pltpu

# ---- small, self-consistent configuration (mirrors the module's __init__ shapes) ----
VOCAB = 64        # vocab_size
EMB = 32          # embedding_dim
HID = 32          # hidden_dim
NLAYERS = 2       # n_layers (kernel hard-codes 2 layers, as in the module)
OUT = 1           # output_size
B = 2             # batch
T = 8             # sequence length
BP = 8            # batch padded to sublane height


def sentiment_lstm_kernel(x_ref,      # (T*Bp, E)   bf16  flattened time-major embeddings
                          w_ref,      # (E+3H, 4H)  bf16  [W_ih0^T; W_hh0^T; W_ih1^T; W_hh1^T]
                                      #                   (g-gate columns pre-scaled x2)
                          bfc_ref,    # (8, 4H)     f32   row0=b0*, row1=b1*, row2[:H]=fc_w,
                                      #                   row3[0]=fc_b (*: g-slice pre-scaled x2)
                          state_ref,  # (Bp, 4H)    f32   packed initial state [h0|h1|c0|c1]
                          out_ref):   # (Bp, 8H)    f32   [h0|h1|c0|c1 | broadcast(sigmoid)]
    TB, E = x_ref.shape
    Bp, G = state_ref.shape
    H = G // 4
    T_ = TB // Bp

    # ---- unpack the lane-dense weight slab (static, tile-aligned slices) ----
    wih0t = w_ref[0:E, :]                   # (E, 4H) bf16
    whh0t = w_ref[E:E + H, :]               # (H, 4H)
    wih1t = w_ref[E + H:E + 2 * H, :]       # (H, 4H)
    whh1t = w_ref[E + 2 * H:E + 3 * H, :]   # (H, 4H)

    b0 = bfc_ref[0:1, :]                                   # (1, 4H) f32
    b1b = jnp.broadcast_to(bfc_ref[1:2, :], (Bp, G))       # hoisted broadcast

    # ---- hoisted, time-parallel layer-0 input projection: one MXU pass, bias fused ----
    # kept as a traced value (8 vregs for T*Bp=64, 4H=128) -- no VMEM scratch round-trip
    gx0 = jnp.dot(x_ref[...], wih0t, preferred_element_type=jnp.float32) + b0   # (T*Bp, 4H)

    # ---- initial state (packed (Bp,4H) -> four (Bp,H) slices) ----
    h0 = state_ref[:, 0 * H:1 * H]
    h1 = state_ref[:, 1 * H:2 * H]
    c0 = state_ref[:, 2 * H:3 * H]
    c1 = state_ref[:, 3 * H:4 * H]

    def gate_apply(gates, c):
        # PyTorch gate order [i, f, g, o]; the g-gate pre-activation was pre-scaled by 2,
        # so a single full-vreg sigmoid covers everything: tanh(x) = 2*sigmoid(2x) - 1.
        s = jax.nn.sigmoid(gates)                 # one (Bp,4H) EUP pass
        i = s[:, 0 * H:1 * H]
        f = s[:, 1 * H:2 * H]
        g = 2.0 * s[:, 2 * H:3 * H] - 1.0         # tanh of the unscaled pre-activation
        o = s[:, 3 * H:4 * H]
        c_new = f * c + i * g
        h_new = o * jnp.tanh(c_new)               # the only remaining tanh per cell
        return h_new, c_new

    # ---- fully static, unrolled recurrence (T=8); static tile-aligned slices of gx0 ----
    for t in range(T_):
        # layer 0: only the recurrent matmul sits on the serial chain
        gates0 = gx0[t * Bp:(t + 1) * Bp, :] + jnp.dot(
            h0.astype(jnp.bfloat16), whh0t, preferred_element_type=jnp.float32)
        h0, c0 = gate_apply(gates0, c0)
        # (inter-layer dropout is identity in eval mode)
        # layer 1: two back-to-back K=32 MXU dots (no per-step concat/cast on the chain)
        gates1 = (jnp.dot(h0.astype(jnp.bfloat16), wih1t, preferred_element_type=jnp.float32)
                  + jnp.dot(h1.astype(jnp.bfloat16), whh1t, preferred_element_type=jnp.float32)
                  + b1b)
        h1, c1 = gate_apply(gates1, c1)

    # ---- fc (output width 1) as VPU multiply + lane reduction, then sigmoid ----
    fcw = bfc_ref[2:3, 0:H]                       # (1, H)
    fcb = bfc_ref[3:4, 0:1]                       # (1, 1)
    logits = jnp.sum(h1 * fcw, axis=-1, keepdims=True) + fcb
    sig = jax.nn.sigmoid(logits)                  # (Bp, 1)

    # ---- single lane-dense output slab (two unmasked 128-lane stores) ----
    out_ref[:, 0:G] = jnp.concatenate([h0, h1, c0, c1], axis=-1)
    out_ref[:, G:2 * G] = jnp.broadcast_to(sig, (Bp, G))


def init_params(key):
    """Deterministic parameter init (uniform, PyTorch-like scale)."""
    k = 1.0 / jnp.sqrt(jnp.float32(HID))
    keys = jax.random.split(key, 12)
    u = lambda kk, shape: jax.random.uniform(kk, shape, jnp.float32, -k, k)
    params = dict(
        emb_table=jax.random.normal(keys[0], (VOCAB, EMB), jnp.float32) * 0.1,
        wih0=u(keys[1], (4 * HID, EMB)),
        whh0=u(keys[2], (4 * HID, HID)),
        bih0=u(keys[3], (4 * HID,)),
        bhh0=u(keys[4], (4 * HID,)),
        wih1=u(keys[5], (4 * HID, HID)),
        whh1=u(keys[6], (4 * HID, HID)),
        bih1=u(keys[7], (4 * HID,)),
        bhh1=u(keys[8], (4 * HID,)),
        fcw=u(keys[9], (OUT, HID)),
        fcb=u(keys[10], (OUT,)),
    )
    return params


def prepare_params(params):
    """One-time weight prep (cache across calls): transpose, pack, pre-scale g gate, bf16 cast.

    Scaling the g-gate rows/bias by 2 is exact in floating point (power of two), so
    2*sigmoid(2x) - 1 == tanh(x) reproduces the original gate bit-for-bit in the pre-activation.
    """
    H = HID

    def scale_g_cols(wt):  # wt: (in, 4H); scale g-gate columns (2H:3H) by 2
        return wt.at[:, 2 * H:3 * H].multiply(2.0)

    wih0t = scale_g_cols(params["wih0"].T)    # (E, 4H)
    whh0t = scale_g_cols(params["whh0"].T)    # (H, 4H)
    wih1t = scale_g_cols(params["wih1"].T)    # (H, 4H)
    whh1t = scale_g_cols(params["whh1"].T)    # (H, 4H)
    w_slab = jnp.concatenate([wih0t, whh0t, wih1t, whh1t],
                             axis=0).astype(jnp.bfloat16)        # (E+3H, 4H) = (128, 128)

    def scale_g_bias(b):
        return b.at[2 * H:3 * H].multiply(2.0)

    b0 = scale_g_bias(params["bih0"] + params["bhh0"])           # (4H,)
    b1 = scale_g_bias(params["bih1"] + params["bhh1"])           # (4H,)

    bfc = jnp.zeros((8, 4 * H), jnp.float32)
    bfc = bfc.at[0].set(b0)
    bfc = bfc.at[1].set(b1)
    bfc = bfc.at[2, :H].set(params["fcw"][0])
    bfc = bfc.at[3, 0].set(params["fcb"][0])

    return dict(emb_table=params["emb_table"], w_slab=w_slab, bfc=bfc)


@jax.jit
def sentiment_lstm_forward(tokens, prepped, hidden):
    """tokens: (B, T) int32;  hidden: (h0, c0) each (n_layers, B, H);  prepped: prepare_params()."""
    Bn, Tn = tokens.shape
    Bp = max(8, ((Bn + 7) // 8) * 8)   # pad batch to sublane height
    H = HID

    # glue: embedding gather + layout transpose + padding + flatten stay in plain JAX
    embeds = jnp.take(prepped["emb_table"], tokens, axis=0)        # (B, T, E)
    embeds_tm = jnp.transpose(embeds, (1, 0, 2))                   # (T, B, E) time-major
    embeds_tm = jnp.pad(embeds_tm, ((0, 0), (0, Bp - Bn), (0, 0)))
    x_flat = embeds_tm.reshape(Tn * Bp, EMB).astype(jnp.bfloat16)  # (T*Bp, E) flattened here

    h_in = jnp.pad(hidden[0], ((0, 0), (0, Bp - Bn), (0, 0)))      # (2, Bp, H)
    c_in = jnp.pad(hidden[1], ((0, 0), (0, Bp - Bn), (0, 0)))
    state = jnp.concatenate([h_in[0], h_in[1], c_in[0], c_in[1]], axis=-1)   # (Bp, 4H)

    vmem = pl.BlockSpec(memory_space=pltpu.MemorySpace.VMEM)
    out = pl.pallas_call(
        sentiment_lstm_kernel,
        out_shape=jax.ShapeDtypeStruct((Bp, 8 * H), jnp.float32),
        in_specs=[vmem] * 4,
        out_specs=vmem,
    )(x_flat, prepped["w_slab"], prepped["bfc"], state)

    h0n = out[:Bn, 0 * H:1 * H]
    h1n = out[:Bn, 1 * H:2 * H]
    c0n = out[:Bn, 2 * H:3 * H]
    c1n = out[:Bn, 3 * H:4 * H]
    sig = out[:Bn, 4 * H]                  # broadcast column 0 of the second half
    return sig, (jnp.stack([h0n, h1n]), jnp.stack([c0n, c1n]))


def reference_forward(tokens, params, hidden, bf16_matmul=True):
    """Pure-JAX reference of the PyTorch forward (eval mode).

    bf16_matmul=True mirrors the kernel's precision (bf16 matmul inputs, f32 acc).
    """
    embeds = jnp.take(params["emb_table"], tokens, axis=0)        # (B, T, E)
    h = [hidden[0][0], hidden[0][1]]
    c = [hidden[1][0], hidden[1][1]]
    b0 = params["bih0"] + params["bhh0"]
    b1 = params["bih1"] + params["bhh1"]
    mm = jnp.bfloat16 if bf16_matmul else jnp.float32

    def cell(x, h_, c_, wih, whh, b):
        g = (jnp.dot(x.astype(mm), wih.T.astype(mm),
                     preferred_element_type=jnp.float32)
             + jnp.dot(h_.astype(mm), whh.T.astype(mm),
                       preferred_element_type=jnp.float32)
             + b)
        i = jax.nn.sigmoid(g[:, 0 * HID:1 * HID])
        f = jax.nn.sigmoid(g[:, 1 * HID:2 * HID])
        gg = jnp.tanh(g[:, 2 * HID:3 * HID])
        o = jax.nn.sigmoid(g[:, 3 * HID:4 * HID])
        c_n = f * c_ + i * gg
        return o * jnp.tanh(c_n), c_n

    for t in range(T):
        x = embeds[:, t, :]
        h[0], c[0] = cell(x, h[0], c[0], params["wih0"], params["whh0"], b0)
        h[1], c[1] = cell(h[0], h[1], c[1], params["wih1"], params["whh1"], b1)

    logits = h[1] @ params["fcw"].T + params["fcb"]
    sig = jax.nn.sigmoid(logits)[:, 0]
    return sig, (jnp.stack(h), jnp.stack(c))


if __name__ == "__main__":
    key = jax.random.PRNGKey(0)
    k_tok, k_par = jax.random.split(key)

    tokens = jax.random.randint(k_tok, (B, T), 0, VOCAB, dtype=jnp.int32)
    params = init_params(k_par)
    prepped = prepare_params(params)   # computed once; reused across forward calls
    # init_hidden: zeros
    hidden = (jnp.zeros((NLAYERS, B, HID), jnp.float32),
              jnp.zeros((NLAYERS, B, HID), jnp.float32))

    sig_out, (hn, cn) = sentiment_lstm_forward(tokens, prepped, hidden)
    jax.block_until_ready((sig_out, hn, cn))

    # tight check against a reference using the kernel's precision (bf16 matmul, f32 acc)
    ref_sig, (ref_hn, ref_cn) = reference_forward(tokens, params, hidden, bf16_matmul=True)
    assert jnp.allclose(sig_out, ref_sig, atol=1e-3, rtol=1e-3)
    assert jnp.allclose(hn, ref_hn, atol=1e-3, rtol=1e-3)
    assert jnp.allclose(cn, ref_cn, atol=1e-3, rtol=1e-3)

    # sanity check against the full-f32 reference (loose tolerance covers bf16 MXU inputs)
    ref_sig32, (ref_hn32, ref_cn32) = reference_forward(tokens, params, hidden, bf16_matmul=False)
    assert jnp.allclose(sig_out, ref_sig32, atol=2e-2, rtol=2e-2)
    assert jnp.allclose(hn, ref_hn32, atol=2e-2, rtol=2e-2)
    assert jnp.allclose(cn, ref_cn32, atol=2e-2, rtol=2e-2)

    print("KERNEL_OK")
</pallas_src>

<mosaic_0001>
module attributes {stable_mosaic.version = 11 : i64} {
  func.func @sentiment_lstm_kernel(%arg0: memref<64x32xbf16, #tpu.memory_space<vmem>>, %arg1: memref<128x128xbf16, #tpu.memory_space<vmem>>, %arg2: memref<8x128xf32, #tpu.memory_space<vmem>>, %arg3: memref<8x128xf32, #tpu.memory_space<vmem>>, %arg4: memref<8x256xf32, #tpu.memory_space<vmem>>) attributes {dimension_semantics = [], scalar_prefetch = 0 : i64, scratch_operands = 0 : i64, tpu.core_type = #tpu.core_type<tc>} {
    %c0 = arith.constant 0 : index
    %c0_0 = arith.constant 0 : index
    %0 = vector.load %arg1[%c0, %c0_0] : memref<128x128xbf16, #tpu.memory_space<vmem>>, vector<32x128xbf16>
    %c32 = arith.constant 32 : index
    %c0_1 = arith.constant 0 : index
    %1 = vector.load %arg1[%c32, %c0_1] : memref<128x128xbf16, #tpu.memory_space<vmem>>, vector<32x128xbf16>
    %c64 = arith.constant 64 : index
    %c0_2 = arith.constant 0 : index
    %2 = vector.load %arg1[%c64, %c0_2] : memref<128x128xbf16, #tpu.memory_space<vmem>>, vector<32x128xbf16>
    %c96 = arith.constant 96 : index
    %c0_3 = arith.constant 0 : index
    %3 = vector.load %arg1[%c96, %c0_3] : memref<128x128xbf16, #tpu.memory_space<vmem>>, vector<32x128xbf16>
    %c0_4 = arith.constant 0 : index
    %c0_5 = arith.constant 0 : index
    %4 = vector.load %arg2[%c0_4, %c0_5] : memref<8x128xf32, #tpu.memory_space<vmem>>, vector<1x128xf32>
    %c1 = arith.constant 1 : index
    %c0_6 = arith.constant 0 : index
    %5 = vector.load %arg2[%c1, %c0_6] : memref<8x128xf32, #tpu.memory_space<vmem>>, vector<1x128xf32>
    %6 = vector.shape_cast %5 : vector<1x128xf32> to vector<1x128xf32>
    %7 = vector.broadcast %6 : vector<1x128xf32> to vector<8x128xf32>
    %c0_7 = arith.constant 0 : index
    %c0_8 = arith.constant 0 : index
    %8 = vector.load %arg0[%c0_7, %c0_8] : memref<64x32xbf16, #tpu.memory_space<vmem>>, vector<64x32xbf16>
    %cst = arith.constant dense<0.000000e+00> : vector<64x128xf32>
    %9 = tpu.matmul %8, %0, %cst {dimension_numbers = #tpu.dot_dimension_numbers<[1], [0], [0], [1], [0, 0, 1, 1], [], []>} : vector<64x32xbf16>, vector<32x128xbf16>, vector<64x128xf32> -> vector<64x128xf32>
    %10 = vector.broadcast %4 : vector<1x128xf32> to vector<64x128xf32>
    %11 = arith.addf %9, %10 : vector<64x128xf32>
    %c0_9 = arith.constant 0 : index
    %c0_10 = arith.constant 0 : index
    %12 = vector.load %arg3[%c0_9, %c0_10] : memref<8x128xf32, #tpu.memory_space<vmem>>, vector<8x32xf32>
    %c0_11 = arith.constant 0 : index
    %c32_12 = arith.constant 32 : index
    %13 = vector.load %arg3[%c0_11, %c32_12] : memref<8x128xf32, #tpu.memory_space<vmem>>, vector<8x32xf32>
    %c0_13 = arith.constant 0 : index
    %c64_14 = arith.constant 64 : index
    %14 = vector.load %arg3[%c0_13, %c64_14] : memref<8x128xf32, #tpu.memory_space<vmem>>, vector<8x32xf32>
    %c0_15 = arith.constant 0 : index
    %c96_16 = arith.constant 96 : index
    %15 = vector.load %arg3[%c0_15, %c96_16] : memref<8x128xf32, #tpu.memory_space<vmem>>, vector<8x32xf32>
    %16 = vector.extract_strided_slice %11 {offsets = [0, 0], sizes = [8, 128], strides = [1, 1]} : vector<64x128xf32> to vector<8x128xf32>
    %17 = arith.truncf %12 : vector<8x32xf32> to vector<8x32xbf16>
    %cst_17 = arith.constant dense<0.000000e+00> : vector<8x128xf32>
    %18 = tpu.matmul %17, %1, %cst_17 {dimension_numbers = #tpu.dot_dimension_numbers<[1], [0], [0], [1], [0, 0, 1, 1], [], []>} : vector<8x32xbf16>, vector<32x128xbf16>, vector<8x128xf32> -> vector<8x128xf32>
    %19 = arith.addf %16, %18 : vector<8x128xf32>
    %20 = arith.negf %19 : vector<8x128xf32>
    %21 = math.exp %20 : vector<8x128xf32>
    %cst_18 = arith.constant 1.000000e+00 : f32
    %22 = vector.broadcast %cst_18 : f32 to vector<8x128xf32>
    %23 = arith.addf %22, %21 : vector<8x128xf32>
    %24 = arith.divf %22, %23 : vector<8x128xf32>
    %25 = vector.extract_strided_slice %24 {offsets = [0, 0], sizes = [8, 32], strides = [1, 1]} : vector<8x128xf32> to vector<8x32xf32>
    %26 = vector.extract_strided_slice %24 {offsets = [0, 32], sizes = [8, 32], strides = [1, 1]} : vector<8x128xf32> to vector<8x32xf32>
    %27 = vector.extract_strided_slice %24 {offsets = [0, 64], sizes = [8, 32], strides = [1, 1]} : vector<8x128xf32> to vector<8x32xf32>
    %cst_19 = arith.constant 2.000000e+00 : f32
    %28 = vector.broadcast %cst_19 : f32 to vector<8x32xf32>
    %29 = arith.mulf %28, %27 : vector<8x32xf32>
    %cst_20 = arith.constant 1.000000e+00 : f32
    %30 = vector.broadcast %cst_20 : f32 to vector<8x32xf32>
    %31 = arith.subf %29, %30 : vector<8x32xf32>
    %32 = vector.extract_strided_slice %24 {offsets = [0, 96], sizes = [8, 32], strides = [1, 1]} : vector<8x128xf32> to vector<8x32xf32>
    %33 = arith.mulf %26, %14 : vector<8x32xf32>
    %34 = arith.mulf %25, %31 : vector<8x32xf32>
    %35 = arith.addf %33, %34 : vector<8x32xf32>
    %36 = math.tanh %35 : vector<8x32xf32>
    %37 = arith.mulf %32, %36 : vector<8x32xf32>
    %38 = arith.truncf %37 : vector<8x32xf32> to vector<8x32xbf16>
    %cst_21 = arith.constant dense<0.000000e+00> : vector<8x128xf32>
    %39 = tpu.matmul %38, %2, %cst_21 {dimension_numbers = #tpu.dot_dimension_numbers<[1], [0], [0], [1], [0, 0, 1, 1], [], []>} : vector<8x32xbf16>, vector<32x128xbf16>, vector<8x128xf32> -> vector<8x128xf32>
    %40 = arith.truncf %13 : vector<8x32xf32> to vector<8x32xbf16>
    %cst_22 = arith.constant dense<0.000000e+00> : vector<8x128xf32>
    %41 = tpu.matmul %40, %3, %cst_22 {dimension_numbers = #tpu.dot_dimension_numbers<[1], [0], [0], [1], [0, 0, 1, 1], [], []>} : vector<8x32xbf16>, vector<32x128xbf16>, vector<8x128xf32> -> vector<8x128xf32>
    %42 = arith.addf %39, %41 : vector<8x128xf32>
    %43 = arith.addf %42, %7 : vector<8x128xf32>
    %44 = arith.negf %43 : vector<8x128xf32>
    %45 = math.exp %44 : vector<8x128xf32>
    %cst_23 = arith.constant 1.000000e+00 : f32
    %46 = vector.broadcast %cst_23 : f32 to vector<8x128xf32>
    %47 = arith.addf %46, %45 : vector<8x128xf32>
    %48 = arith.divf %46, %47 : vector<8x128xf32>
    %49 = vector.extract_strided_slice %48 {offsets = [0, 0], sizes = [8, 32], strides = [1, 1]} : vector<8x128xf32> to vector<8x32xf32>
    %50 = vector.extract_strided_slice %48 {offsets = [0, 32], sizes = [8, 32], strides = [1, 1]} : vector<8x128xf32> to vector<8x32xf32>
    %51 = vector.extract_strided_slice %48 {offsets = [0, 64], sizes = [8, 32], strides = [1, 1]} : vector<8x128xf32> to vector<8x32xf32>
    %cst_24 = arith.constant 2.000000e+00 : f32
    %52 = vector.broadcast %cst_24 : f32 to vector<8x32xf32>
    %53 = arith.mulf %52, %51 : vector<8x32xf32>
    %cst_25 = arith.constant 1.000000e+00 : f32
    %54 = vector.broadcast %cst_25 : f32 to vector<8x32xf32>
    %55 = arith.subf %53, %54 : vector<8x32xf32>
    %56 = vector.extract_strided_slice %48 {offsets = [0, 96], sizes = [8, 32], strides = [1, 1]} : vector<8x128xf32> to vector<8x32xf32>
    %57 = arith.mulf %50, %15 : vector<8x32xf32>
    %58 = arith.mulf %49, %55 : vector<8x32xf32>
    %59 = arith.addf %57, %58 : vector<8x32xf32>
    %60 = math.tanh %59 : vector<8x32xf32>
    %61 = arith.mulf %56, %60 : vector<8x32xf32>
    %62 = vector.extract_strided_slice %11 {offsets = [8, 0], sizes = [8, 128], strides = [1, 1]} : vector<64x128xf32> to vector<8x128xf32>
    %63 = arith.truncf %37 : vector<8x32xf32> to vector<8x32xbf16>
    %cst_26 = arith.constant dense<0.000000e+00> : vector<8x128xf32>
    %64 = tpu.matmul %63, %1, %cst_26 {dimension_numbers = #tpu.dot_dimension_numbers<[1], [0], [0], [1], [0, 0, 1, 1], [], []>} : vector<8x32xbf16>, vector<32x128xbf16>, vector<8x128xf32> -> vector<8x128xf32>
    %65 = arith.addf %62, %64 : vector<8x128xf32>
    %66 = arith.negf %65 : vector<8x128xf32>
    %67 = math.exp %66 : vector<8x128xf32>
    %cst_27 = arith.constant 1.000000e+00 : f32
    %68 = vector.broadcast %cst_27 : f32 to vector<8x128xf32>
    %69 = arith.addf %68, %67 : vector<8x128xf32>
    %70 = arith.divf %68, %69 : vector<8x128xf32>
    %71 = vector.extract_strided_slice %70 {offsets = [0, 0], sizes = [8, 32], strides = [1, 1]} : vector<8x128xf32> to vector<8x32xf32>
    %72 = vector.extract_strided_slice %70 {offsets = [0, 32], sizes = [8, 32], strides = [1, 1]} : vector<8x128xf32> to vector<8x32xf32>
    %73 = vector.extract_strided_slice %70 {offsets = [0, 64], sizes = [8, 32], strides = [1, 1]} : vector<8x128xf32> to vector<8x32xf32>
    %cst_28 = arith.constant 2.000000e+00 : f32
    %74 = vector.broadcast %cst_28 : f32 to vector<8x32xf32>
    %75 = arith.mulf %74, %73 : vector<8x32xf32>
    %cst_29 = arith.constant 1.000000e+00 : f32
    %76 = vector.broadcast %cst_29 : f32 to vector<8x32xf32>
    %77 = arith.subf %75, %76 : vector<8x32xf32>
    %78 = vector.extract_strided_slice %70 {offsets = [0, 96], sizes = [8, 32], strides = [1, 1]} : vector<8x128xf32> to vector<8x32xf32>
    %79 = arith.mulf %72, %35 : vector<8x32xf32>
    %80 = arith.mulf %71, %77 : vector<8x32xf32>
    %81 = arith.addf %79, %80 : vector<8x32xf32>
    %82 = math.tanh %81 : vector<8x32xf32>
    %83 = arith.mulf %78, %82 : vector<8x32xf32>
    %84 = arith.truncf %83 : vector<8x32xf32> to vector<8x32xbf16>
    %cst_30 = arith.constant dense<0.000000e+00> : vector<8x128xf32>
    %85 = tpu.matmul %84, %2, %cst_30 {dimension_numbers = #tpu.dot_dimension_numbers<[1], [0], [0], [1], [0, 0, 1, 1], [], []>} : vector<8x32xbf16>, vector<32x128xbf16>, vector<8x128xf32> -> vector<8x128xf32>
    %86 = arith.truncf %61 : vector<8x32xf32> to vector<8x32xbf16>
    %cst_31 = arith.constant dense<0.000000e+00> : vector<8x128xf32>
    %87 = tpu.matmul %86, %3, %cst_31 {dimension_numbers = #tpu.dot_dimension_numbers<[1], [0], [0], [1], [0, 0, 1, 1], [], []>} : vector<8x32xbf16>, vector<32x128xbf16>, vector<8x128xf32> -> vector<8x128xf32>
    %88 = arith.addf %85, %87 : vector<8x128xf32>
    %89 = arith.addf %88, %7 : vector<8x128xf32>
    %90 = arith.negf %89 : vector<8x128xf32>
    %91 = math.exp %90 : vector<8x128xf32>
    %cst_32 = arith.constant 1.000000e+00 : f32
    %92 = vector.broadcast %cst_32 : f32 to vector<8x128xf32>
    %93 = arith.addf %92, %91 : vector<8x128xf32>
    %94 = arith.divf %92, %93 : vector<8x128xf32>
    %95 = vector.extract_strided_slice %94 {offsets = [0, 0], sizes = [8, 32], strides = [1, 1]} : vector<8x128xf32> to vector<8x32xf32>
    %96 = vector.extract_strided_slice %94 {offsets = [0, 32], sizes = [8, 32], strides = [1, 1]} : vector<8x128xf32> to vector<8x32xf32>
    %97 = vector.extract_strided_slice %94 {offsets = [0, 64], sizes = [8, 32], strides = [1, 1]} : vector<8x128xf32> to vector<8x32xf32>
    %cst_33 = arith.constant 2.000000e+00 : f32
    %98 = vector.broadcast %cst_33 : f32 to vector<8x32xf32>
    %99 = arith.mulf %98, %97 : vector<8x32xf32>
    %cst_34 = arith.constant 1.000000e+00 : f32
    %100 = vector.broadcast %cst_34 : f32 to vector<8x32xf32>
    %101 = arith.subf %99, %100 : vector<8x32xf32>
    %102 = vector.extract_strided_slice %94 {offsets = [0, 96], sizes = [8, 32], strides = [1, 1]} : vector<8x128xf32> to vector<8x32xf32>
    %103 = arith.mulf %96, %59 : vector<8x32xf32>
    %104 = arith.mulf %95, %101 : vector<8x32xf32>
    %105 = arith.addf %103, %104 : vector<8x32xf32>
    %106 = math.tanh %105 : vector<8x32xf32>
    %107 = arith.mulf %102, %106 : vector<8x32xf32>
    %108 = vector.extract_strided_slice %11 {offsets = [16, 0], sizes = [8, 128], strides = [1, 1]} : vector<64x128xf32> to vector<8x128xf32>
    %109 = arith.truncf %83 : vector<8x32xf32> to vector<8x32xbf16>
    %cst_35 = arith.constant dense<0.000000e+00> : vector<8x128xf32>
    %110 = tpu.matmul %109, %1, %cst_35 {dimension_numbers = #tpu.dot_dimension_numbers<[1], [0], [0], [1], [0, 0, 1, 1], [], []>} : vector<8x32xbf16>, vector<32x128xbf16>, vector<8x128xf32> -> vector<8x128xf32>
    %111 = arith.addf %108, %110 : vector<8x128xf32>
    %112 = arith.negf %111 : vector<8x128xf32>
    %113 = math.exp %112 : vector<8x128xf32>
    %cst_36 = arith.constant 1.000000e+00 : f32
    %114 = vector.broadcast %cst_36 : f32 to vector<8x128xf32>
    %115 = arith.addf %114, %113 : vector<8x128xf32>
    %116 = arith.divf %114, %115 : vector<8x128xf32>
    %117 = vector.extract_strided_slice %116 {offsets = [0, 0], sizes = [8, 32], strides = [1, 1]} : vector<8x128xf32> to vector<8x32xf32>
    %118 = vector.extract_strided_slice %116 {offsets = [0, 32], sizes = [8, 32], strides = [1, 1]} : vector<8x128xf32> to vector<8x32xf32>
    %119 = vector.extract_strided_slice %116 {offsets = [0, 64], sizes = [8, 32], strides = [1, 1]} : vector<8x128xf32> to vector<8x32xf32>
    %cst_37 = arith.constant 2.000000e+00 : f32
    %120 = vector.broadcast %cst_37 : f32 to vector<8x32xf32>
    %121 = arith.mulf %120, %119 : vector<8x32xf32>
    %cst_38 = arith.constant 1.000000e+00 : f32
    %122 = vector.broadcast %cst_38 : f32 to vector<8x32xf32>
    %123 = arith.subf %121, %122 : vector<8x32xf32>
    %124 = vector.extract_strided_slice %116 {offsets = [0, 96], sizes = [8, 32], strides = [1, 1]} : vector<8x128xf32> to vector<8x32xf32>
    %125 = arith.mulf %118, %81 : vector<8x32xf32>
    %126 = arith.mulf %117, %123 : vector<8x32xf32>
    %127 = arith.addf %125, %126 : vector<8x32xf32>
    %128 = math.tanh %127 : vector<8x32xf32>
    %129 = arith.mulf %124, %128 : vector<8x32xf32>
    %130 = arith.truncf %129 : vector<8x32xf32> to vector<8x32xbf16>
    %cst_39 = arith.constant dense<0.000000e+00> : vector<8x128xf32>
    %131 = tpu.matmul %130, %2, %cst_39 {dimension_numbers = #tpu.dot_dimension_numbers<[1], [0], [0], [1], [0, 0, 1, 1], [], []>} : vector<8x32xbf16>, vector<32x128xbf16>, vector<8x128xf32> -> vector<8x128xf32>
    %132 = arith.truncf %107 : vector<8x32xf32> to vector<8x32xbf16>
    %cst_40 = arith.constant dense<0.000000e+00> : vector<8x128xf32>
    %133 = tpu.matmul %132, %3, %cst_40 {dimension_numbers = #tpu.dot_dimension_numbers<[1], [0], [0], [1], [0, 0, 1, 1], [], []>} : vector<8x32xbf16>, vector<32x128xbf16>, vector<8x128xf32> -> vector<8x128xf32>
    %134 = arith.addf %131, %133 : vector<8x128xf32>
    %135 = arith.addf %134, %7 : vector<8x128xf32>
    %136 = arith.negf %135 : vector<8x128xf32>
    %137 = math.exp %136 : vector<8x128xf32>
    %cst_41 = arith.constant 1.000000e+00 : f32
    %138 = vector.broadcast %cst_41 : f32 to vector<8x128xf32>
    %139 = arith.addf %138, %137 : vector<8x128xf32>
    %140 = arith.divf %138, %139 : vector<8x128xf32>
    %141 = vector.extract_strided_slice %140 {offsets = [0, 0], sizes = [8, 32], strides = [1, 1]} : vector<8x128xf32> to vector<8x32xf32>
    %142 = vector.extract_strided_slice %140 {offsets = [0, 32], sizes = [8, 32], strides = [1, 1]} : vector<8x128xf32> to vector<8x32xf32>
    %143 = vector.extract_strided_slice %140 {offsets = [0, 64], sizes = [8, 32], strides = [1, 1]} : vector<8x128xf32> to vector<8x32xf32>
    %cst_42 = arith.constant 2.000000e+00 : f32
    %144 = vector.broadcast %cst_42 : f32 to vector<8x32xf32>
    %145 = arith.mulf %144, %143 : vector<8x32xf32>
    %cst_43 = arith.constant 1.000000e+00 : f32
    %146 = vector.broadcast %cst_43 : f32 to vector<8x32xf32>
    %147 = arith.subf %145, %146 : vector<8x32xf32>
    %148 = vector.extract_strided_slice %140 {offsets = [0, 96], sizes = [8, 32], strides = [1, 1]} : vector<8x128xf32> to vector<8x32xf32>
    %149 = arith.mulf %142, %105 : vector<8x32xf32>
    %150 = arith.mulf %141, %147 : vector<8x32xf32>
    %151 = arith.addf %149, %150 : vector<8x32xf32>
    %152 = math.tanh %151 : vector<8x32xf32>
    %153 = arith.mulf %148, %152 : vector<8x32xf32>
    %154 = vector.extract_strided_slice %11 {offsets = [24, 0], sizes = [8, 128], strides = [1, 1]} : vector<64x128xf32> to vector<8x128xf32>
    %155 = arith.truncf %129 : vector<8x32xf32> to vector<8x32xbf16>
    %cst_44 = arith.constant dense<0.000000e+00> : vector<8x128xf32>
    %156 = tpu.matmul %155, %1, %cst_44 {dimension_numbers = #tpu.dot_dimension_numbers<[1], [0], [0], [1], [0, 0, 1, 1], [], []>} : vector<8x32xbf16>, vector<32x128xbf16>, vector<8x128xf32> -> vector<8x128xf32>
    %157 = arith.addf %154, %156 : vector<8x128xf32>
    %158 = arith.negf %157 : vector<8x128xf32>
    %159 = math.exp %158 : vector<8x128xf32>
    %cst_45 = arith.constant 1.000000e+00 : f32
    %160 = vector.broadcast %cst_45 : f32 to vector<8x128xf32>
    %161 = arith.addf %160, %159 : vector<8x128xf32>
    %162 = arith.divf %160, %161 : vector<8x128xf32>
    %163 = vector.extract_strided_slice %162 {offsets = [0, 0], sizes = [8, 32], strides = [1, 1]} : vector<8x128xf32> to vector<8x32xf32>
    %164 = vector.extract_strided_slice %162 {offsets = [0, 32], sizes = [8, 32], strides = [1, 1]} : vector<8x128xf32> to vector<8x32xf32>
    %165 = vector.extract_strided_slice %162 {offsets = [0, 64], sizes = [8, 32], strides = [1, 1]} : vector<8x128xf32> to vector<8x32xf32>
    %cst_46 = arith.constant 2.000000e+00 : f32
    %166 = vector.broadcast %cst_46 : f32 to vector<8x32xf32>
    %167 = arith.mulf %166, %165 : vector<8x32xf32>
    %cst_47 = arith.constant 1.000000e+00 : f32
    %168 = vector.broadcast %cst_47 : f32 to vector<8x32xf32>
    %169 = arith.subf %167, %168 : vector<8x32xf32>
    %170 = vector.extract_strided_slice %162 {offsets = [0, 96], sizes = [8, 32], strides = [1, 1]} : vector<8x128xf32> to vector<8x32xf32>
    %171 = arith.mulf %164, %127 : vector<8x32xf32>
    %172 = arith.mulf %163, %169 : vector<8x32xf32>
    %173 = arith.addf %171, %172 : vector<8x32xf32>
    %174 = math.tanh %173 : vector<8x32xf32>
    %175 = arith.mulf %170, %174 : vector<8x32xf32>
    %176 = arith.truncf %175 : vector<8x32xf32> to vector<8x32xbf16>
    %cst_48 = arith.constant dense<0.000000e+00> : vector<8x128xf32>
    %177 = tpu.matmul %176, %2, %cst_48 {dimension_numbers = #tpu.dot_dimension_numbers<[1], [0], [0], [1], [0, 0, 1, 1], [], []>} : vector<8x32xbf16>, vector<32x128xbf16>, vector<8x128xf32> -> vector<8x128xf32>
    %178 = arith.truncf %153 : vector<8x32xf32> to vector<8x32xbf16>
    %cst_49 = arith.constant dense<0.000000e+00> : vector<8x128xf32>
    %179 = tpu.matmul %178, %3, %cst_49 {dimension_numbers = #tpu.dot_dimension_numbers<[1], [0], [0], [1], [0, 0, 1, 1], [], []>} : vector<8x32xbf16>, vector<32x128xbf16>, vector<8x128xf32> -> vector<8x128xf32>
    %180 = arith.addf %177, %179 : vector<8x128xf32>
    %181 = arith.addf %180, %7 : vector<8x128xf32>
    %182 = arith.negf %181 : vector<8x128xf32>
    %183 = math.exp %182 : vector<8x128xf32>
    %cst_50 = arith.constant 1.000000e+00 : f32
    %184 = vector.broadcast %cst_50 : f32 to vector<8x128xf32>
    %185 = arith.addf %184, %183 : vector<8x128xf32>
    %186 = arith.divf %184, %185 : vector<8x128xf32>
    %187 = vector.extract_strided_slice %186 {offsets = [0, 0], sizes = [8, 32], strides = [1, 1]} : vector<8x128xf32> to vector<8x32xf32>
    %188 = vector.extract_strided_slice %186 {offsets = [0, 32], sizes = [8, 32], strides = [1, 1]} : vector<8x128xf32> to vector<8x32xf32>
    %189 = vector.extract_strided_slice %186 {offsets = [0, 64], sizes = [8, 32], strides = [1, 1]} : vector<8x128xf32> to vector<8x32xf32>
    %cst_51 = arith.constant 2.000000e+00 : f32
    %190 = vector.broadcast %cst_51 : f32 to vector<8x32xf32>
    %191 = arith.mulf %190, %189 : vector<8x32xf32>
    %cst_52 = arith.constant 1.000000e+00 : f32
    %192 = vector.broadcast %cst_52 : f32 to vector<8x32xf32>
    %193 = arith.subf %191, %192 : vector<8x32xf32>
    %194 = vector.extract_strided_slice %186 {offsets = [0, 96], sizes = [8, 32], strides = [1, 1]} : vector<8x128xf32> to vector<8x32xf32>
    %195 = arith.mulf %188, %151 : vector<8x32xf32>
    %196 = arith.mulf %187, %193 : vector<8x32xf32>
    %197 = arith.addf %195, %196 : vector<8x32xf32>
    %198 = math.tanh %197 : vector<8x32xf32>
    %199 = arith.mulf %194, %198 : vector<8x32xf32>
    %200 = vector.extract_strided_slice %11 {offsets = [32, 0], sizes = [8, 128], strides = [1, 1]} : vector<64x128xf32> to vector<8x128xf32>
    %201 = arith.truncf %175 : vector<8x32xf32> to vector<8x32xbf16>
    %cst_53 = arith.constant dense<0.000000e+00> : vector<8x128xf32>
    %202 = tpu.matmul %201, %1, %cst_53 {dimension_numbers = #tpu.dot_dimension_numbers<[1], [0], [0], [1], [0, 0, 1, 1], [], []>} : vector<8x32xbf16>, vector<32x128xbf16>, vector<8x128xf32> -> vector<8x128xf32>
    %203 = arith.addf %200, %202 : vector<8x128xf32>
    %204 = arith.negf %203 : vector<8x128xf32>
    %205 = math.exp %204 : vector<8x128xf32>
    %cst_54 = arith.constant 1.000000e+00 : f32
    %206 = vector.broadcast %cst_54 : f32 to vector<8x128xf32>
    %207 = arith.addf %206, %205 : vector<8x128xf32>
    %208 = arith.divf %206, %207 : vector<8x128xf32>
    %209 = vector.extract_strided_slice %208 {offsets = [0, 0], sizes = [8, 32], strides = [1, 1]} : vector<8x128xf32> to vector<8x32xf32>
    %210 = vector.extract_strided_slice %208 {offsets = [0, 32], sizes = [8, 32], strides = [1, 1]} : vector<8x128xf32> to vector<8x32xf32>
    %211 = vector.extract_strided_slice %208 {offsets = [0, 64], sizes = [8, 32], strides = [1, 1]} : vector<8x128xf32> to vector<8x32xf32>
    %cst_55 = arith.constant 2.000000e+00 : f32
    %212 = vector.broadcast %cst_55 : f32 to vector<8x32xf32>
    %213 = arith.mulf %212, %211 : vector<8x32xf32>
    %cst_56 = arith.constant 1.000000e+00 : f32
    %214 = vector.broadcast %cst_56 : f32 to vector<8x32xf32>
    %215 = arith.subf %213, %214 : vector<8x32xf32>
    %216 = vector.extract_strided_slice %208 {offsets = [0, 96], sizes = [8, 32], strides = [1, 1]} : vector<8x128xf32> to vector<8x32xf32>
    %217 = arith.mulf %210, %173 : vector<8x32xf32>
    %218 = arith.mulf %209, %215 : vector<8x32xf32>
    %219 = arith.addf %217, %218 : vector<8x32xf32>
    %220 = math.tanh %219 : vector<8x32xf32>
    %221 = arith.mulf %216, %220 : vector<8x32xf32>
    %222 = arith.truncf %221 : vector<8x32xf32> to vector<8x32xbf16>
    %cst_57 = arith.constant dense<0.000000e+00> : vector<8x128xf32>
    %223 = tpu.matmul %222, %2, %cst_57 {dimension_numbers = #tpu.dot_dimension_numbers<[1], [0], [0], [1], [0, 0, 1, 1], [], []>} : vector<8x32xbf16>, vector<32x128xbf16>, vector<8x128xf32> -> vector<8x128xf32>
    %224 = arith.truncf %199 : vector<8x32xf32> to vector<8x32xbf16>
    %cst_58 = arith.constant dense<0.000000e+00> : vector<8x128xf32>
    %225 = tpu.matmul %224, %3, %cst_58 {dimension_numbers = #tpu.dot_dimension_numbers<[1], [0], [0], [1], [0, 0, 1, 1], [], []>} : vector<8x32xbf16>, vector<32x128xbf16>, vector<8x128xf32> -> vector<8x128xf32>
    %226 = arith.addf %223, %225 : vector<8x128xf32>
    %227 = arith.addf %226, %7 : vector<8x128xf32>
    %228 = arith.negf %227 : vector<8x128xf32>
    %229 = math.exp %228 : vector<8x128xf32>
    %cst_59 = arith.constant 1.000000e+00 : f32
    %230 = vector.broadcast %cst_59 : f32 to vector<8x128xf32>
    %231 = arith.addf %230, %229 : vector<8x128xf32>
    %232 = arith.divf %230, %231 : vector<8x128xf32>
    %233 = vector.extract_strided_slice %232 {offsets = [0, 0], sizes = [8, 32], strides = [1, 1]} : vector<8x128xf32> to vector<8x32xf32>
    %234 = vector.extract_strided_slice %232 {offsets = [0, 32], sizes = [8, 32], strides = [1, 1]} : vector<8x128xf32> to vector<8x32xf32>
    %235 = vector.extract_strided_slice %232 {offsets = [0, 64], sizes = [8, 32], strides = [1, 1]} : vector<8x128xf32> to vector<8x32xf32>
    %cst_60 = arith.constant 2.000000e+00 : f32
    %236 = vector.broadcast %cst_60 : f32 to vector<8x32xf32>
    %237 = arith.mulf %236, %235 : vector<8x32xf32>
    %cst_61 = arith.constant 1.000000e+00 : f32
    %238 = vector.broadcast %cst_61 : f32 to vector<8x32xf32>
    %239 = arith.subf %237, %238 : vector<8x32xf32>
    %240 = vector.extract_strided_slice %232 {offsets = [0, 96], sizes = [8, 32], strides = [1, 1]} : vector<8x128xf32> to vector<8x32xf32>
    %241 = arith.mulf %234, %197 : vector<8x32xf32>
    %242 = arith.mulf %233, %239 : vector<8x32xf32>
    %243 = arith.addf %241, %242 : vector<8x32xf32>
    %244 = math.tanh %243 : vector<8x32xf32>
    %245 = arith.mulf %240, %244 : vector<8x32xf32>
    %246 = vector.extract_strided_slice %11 {offsets = [40, 0], sizes = [8, 128], strides = [1, 1]} : vector<64x128xf32> to vector<8x128xf32>
    %247 = arith.truncf %221 : vector<8x32xf32> to vector<8x32xbf16>
    %cst_62 = arith.constant dense<0.000000e+00> : vector<8x128xf32>
    %248 = tpu.matmul %247, %1, %cst_62 {dimension_numbers = #tpu.dot_dimension_numbers<[1], [0], [0], [1], [0, 0, 1, 1], [], []>} : vector<8x32xbf16>, vector<32x128xbf16>, vector<8x128xf32> -> vector<8x128xf32>
    %249 = arith.addf %246, %248 : vector<8x128xf32>
    %250 = arith.negf %249 : vector<8x128xf32>
    %251 = math.exp %250 : vector<8x128xf32>
    %cst_63 = arith.constant 1.000000e+00 : f32
    %252 = vector.broadcast %cst_63 : f32 to vector<8x128xf32>
    %253 = arith.addf %252, %251 : vector<8x128xf32>
    %254 = arith.divf %252, %253 : vector<8x128xf32>
    %255 = vector.extract_strided_slice %254 {offsets = [0, 0], sizes = [8, 32], strides = [1, 1]} : vector<8x128xf32> to vector<8x32xf32>
    %256 = vector.extract_strided_slice %254 {offsets = [0, 32], sizes = [8, 32], strides = [1, 1]} : vector<8x128xf32> to vector<8x32xf32>
    %257 = vector.extract_strided_slice %254 {offsets = [0, 64], sizes = [8, 32], strides = [1, 1]} : vector<8x128xf32> to vector<8x32xf32>
    %cst_64 = arith.constant 2.000000e+00 : f32
    %258 = vector.broadcast %cst_64 : f32 to vector<8x32xf32>
    %259 = arith.mulf %258, %257 : vector<8x32xf32>
    %cst_65 = arith.constant 1.000000e+00 : f32
    %260 = vector.broadcast %cst_65 : f32 to vector<8x32xf32>
    %261 = arith.subf %259, %260 : vector<8x32xf32>
    %262 = vector.extract_strided_slice %254 {offsets = [0, 96], sizes = [8, 32], strides = [1, 1]} : vector<8x128xf32> to vector<8x32xf32>
    %263 = arith.mulf %256, %219 : vector<8x32xf32>
    %264 = arith.mulf %255, %261 : vector<8x32xf32>
    %265 = arith.addf %263, %264 : vector<8x32xf32>
    %266 = math.tanh %265 : vector<8x32xf32>
    %267 = arith.mulf %262, %266 : vector<8x32xf32>
    %268 = arith.truncf %267 : vector<8x32xf32> to vector<8x32xbf16>
    %cst_66 = arith.constant dense<0.000000e+00> : vector<8x128xf32>
    %269 = tpu.matmul %268, %2, %cst_66 {dimension_numbers = #tpu.dot_dimension_numbers<[1], [0], [0], [1], [0, 0, 1, 1], [], []>} : vector<8x32xbf16>, vector<32x128xbf16>, vector<8x128xf32> -> vector<8x128xf32>
    %270 = arith.truncf %245 : vector<8x32xf32> to vector<8x32xbf16>
    %cst_67 = arith.constant dense<0.000000e+00> : vector<8x128xf32>
    %271 = tpu.matmul %270, %3, %cst_67 {dimension_numbers = #tpu.dot_dimension_numbers<[1], [0], [0], [1], [0, 0, 1, 1], [], []>} : vector<8x32xbf16>, vector<32x128xbf16>, vector<8x128xf32> -> vector<8x128xf32>
    %272 = arith.addf %269, %271 : vector<8x128xf32>
    %273 = arith.addf %272, %7 : vector<8x128xf32>
    %274 = arith.negf %273 : vector<8x128xf32>
    %275 = math.exp %274 : vector<8x128xf32>
    %cst_68 = arith.constant 1.000000e+00 : f32
    %276 = vector.broadcast %cst_68 : f32 to vector<8x128xf32>
    %277 = arith.addf %276, %275 : vector<8x128xf32>
    %278 = arith.divf %276, %277 : vector<8x128xf32>
    %279 = vector.extract_strided_slice %278 {offsets = [0, 0], sizes = [8, 32], strides = [1, 1]} : vector<8x128xf32> to vector<8x32xf32>
    %280 = vector.extract_strided_slice %278 {offsets = [0, 32], sizes = [8, 32], strides = [1, 1]} : vector<8x128xf32> to vector<8x32xf32>
    %281 = vector.extract_strided_slice %278 {offsets = [0, 64], sizes = [8, 32], strides = [1, 1]} : vector<8x128xf32> to vector<8x32xf32>
    %cst_69 = arith.constant 2.000000e+00 : f32
    %282 = vector.broadcast %cst_69 : f32 to vector<8x32xf32>
    %283 = arith.mulf %282, %281 : vector<8x32xf32>
    %cst_70 = arith.constant 1.000000e+00 : f32
    %284 = vector.broadcast %cst_70 : f32 to vector<8x32xf32>
    %285 = arith.subf %283, %284 : vector<8x32xf32>
    %286 = vector.extract_strided_slice %278 {offsets = [0, 96], sizes = [8, 32], strides = [1, 1]} : vector<8x128xf32> to vector<8x32xf32>
    %287 = arith.mulf %280, %243 : vector<8x32xf32>
    %288 = arith.mulf %279, %285 : vector<8x32xf32>
    %289 = arith.addf %287, %288 : vector<8x32xf32>
    %290 = math.tanh %289 : vector<8x32xf32>
    %291 = arith.mulf %286, %290 : vector<8x32xf32>
    %292 = vector.extract_strided_slice %11 {offsets = [48, 0], sizes = [8, 128], strides = [1, 1]} : vector<64x128xf32> to vector<8x128xf32>
    %293 = arith.truncf %267 : vector<8x32xf32> to vector<8x32xbf16>
    %cst_71 = arith.constant dense<0.000000e+00> : vector<8x128xf32>
    %294 = tpu.matmul %293, %1, %cst_71 {dimension_numbers = #tpu.dot_dimension_numbers<[1], [0], [0], [1], [0, 0, 1, 1], [], []>} : vector<8x32xbf16>, vector<32x128xbf16>, vector<8x128xf32> -> vector<8x128xf32>
    %295 = arith.addf %292, %294 : vector<8x128xf32>
    %296 = arith.negf %295 : vector<8x128xf32>
    %297 = math.exp %296 : vector<8x128xf32>
    %cst_72 = arith.constant 1.000000e+00 : f32
    %298 = vector.broadcast %cst_72 : f32 to vector<8x128xf32>
    %299 = arith.addf %298, %297 : vector<8x128xf32>
    %300 = arith.divf %298, %299 : vector<8x128xf32>
    %301 = vector.extract_strided_slice %300 {offsets = [0, 0], sizes = [8, 32], strides = [1, 1]} : vector<8x128xf32> to vector<8x32xf32>
    %302 = vector.extract_strided_slice %300 {offsets = [0, 32], sizes = [8, 32], strides = [1, 1]} : vector<8x128xf32> to vector<8x32xf32>
    %303 = vector.extract_strided_slice %300 {offsets = [0, 64], sizes = [8, 32], strides = [1, 1]} : vector<8x128xf32> to vector<8x32xf32>
    %cst_73 = arith.constant 2.000000e+00 : f32
    %304 = vector.broadcast %cst_73 : f32 to vector<8x32xf32>
    %305 = arith.mulf %304, %303 : vector<8x32xf32>
    %cst_74 = arith.constant 1.000000e+00 : f32
    %306 = vector.broadcast %cst_74 : f32 to vector<8x32xf32>
    %307 = arith.subf %305, %306 : vector<8x32xf32>
    %308 = vector.extract_strided_slice %300 {offsets = [0, 96], sizes = [8, 32], strides = [1, 1]} : vector<8x128xf32> to vector<8x32xf32>
    %309 = arith.mulf %302, %265 : vector<8x32xf32>
    %310 = arith.mulf %301, %307 : vector<8x32xf32>
    %311 = arith.addf %309, %310 : vector<8x32xf32>
    %312 = math.tanh %311 : vector<8x32xf32>
    %313 = arith.mulf %308, %312 : vector<8x32xf32>
    %314 = arith.truncf %313 : vector<8x32xf32> to vector<8x32xbf16>
    %cst_75 = arith.constant dense<0.000000e+00> : vector<8x128xf32>
    %315 = tpu.matmul %314, %2, %cst_75 {dimension_numbers = #tpu.dot_dimension_numbers<[1], [0], [0], [1], [0, 0, 1, 1], [], []>} : vector<8x32xbf16>, vector<32x128xbf16>, vector<8x128xf32> -> vector<8x128xf32>
    %316 = arith.truncf %291 : vector<8x32xf32> to vector<8x32xbf16>
    %cst_76 = arith.constant dense<0.000000e+00> : vector<8x128xf32>
    %317 = tpu.matmul %316, %3, %cst_76 {dimension_numbers = #tpu.dot_dimension_numbers<[1], [0], [0], [1], [0, 0, 1, 1], [], []>} : vector<8x32xbf16>, vector<32x128xbf16>, vector<8x128xf32> -> vector<8x128xf32>
    %318 = arith.addf %315, %317 : vector<8x128xf32>
    %319 = arith.addf %318, %7 : vector<8x128xf32>
    %320 = arith.negf %319 : vector<8x128xf32>
    %321 = math.exp %320 : vector<8x128xf32>
    %cst_77 = arith.constant 1.000000e+00 : f32
    %322 = vector.broadcast %cst_77 : f32 to vector<8x128xf32>
    %323 = arith.addf %322, %321 : vector<8x128xf32>
    %324 = arith.divf %322, %323 : vector<8x128xf32>
    %325 = vector.extract_strided_slice %324 {offsets = [0, 0], sizes = [8, 32], strides = [1, 1]} : vector<8x128xf32> to vector<8x32xf32>
    %326 = vector.extract_strided_slice %324 {offsets = [0, 32], sizes = [8, 32], strides = [1, 1]} : vector<8x128xf32> to vector<8x32xf32>
    %327 = vector.extract_strided_slice %324 {offsets = [0, 64], sizes = [8, 32], strides = [1, 1]} : vector<8x128xf32> to vector<8x32xf32>
    %cst_78 = arith.constant 2.000000e+00 : f32
    %328 = vector.broadcast %cst_78 : f32 to vector<8x32xf32>
    %329 = arith.mulf %328, %327 : vector<8x32xf32>
    %cst_79 = arith.constant 1.000000e+00 : f32
    %330 = vector.broadcast %cst_79 : f32 to vector<8x32xf32>
    %331 = arith.subf %329, %330 : vector<8x32xf32>
    %332 = vector.extract_strided_slice %324 {offsets = [0, 96], sizes = [8, 32], strides = [1, 1]} : vector<8x128xf32> to vector<8x32xf32>
    %333 = arith.mulf %326, %289 : vector<8x32xf32>
    %334 = arith.mulf %325, %331 : vector<8x32xf32>
    %335 = arith.addf %333, %334 : vector<8x32xf32>
    %336 = math.tanh %335 : vector<8x32xf32>
    %337 = arith.mulf %332, %336 : vector<8x32xf32>
    %338 = vector.extract_strided_slice %11 {offsets = [56, 0], sizes = [8, 128], strides = [1, 1]} : vector<64x128xf32> to vector<8x128xf32>
    %339 = arith.truncf %313 : vector<8x32xf32> to vector<8x32xbf16>
    %cst_80 = arith.constant dense<0.000000e+00> : vector<8x128xf32>
    %340 = tpu.matmul %339, %1, %cst_80 {dimension_numbers = #tpu.dot_dimension_numbers<[1], [0], [0], [1], [0, 0, 1, 1], [], []>} : vector<8x32xbf16>, vector<32x128xbf16>, vector<8x128xf32> -> vector<8x128xf32>
    %341 = arith.addf %338, %340 : vector<8x128xf32>
    %342 = arith.negf %341 : vector<8x128xf32>
    %343 = math.exp %342 : vector<8x128xf32>
    %cst_81 = arith.constant 1.000000e+00 : f32
    %344 = vector.broadcast %cst_81 : f32 to vector<8x128xf32>
    %345 = arith.addf %344, %343 : vector<8x128xf32>
    %346 = arith.divf %344, %345 : vector<8x128xf32>
    %347 = vector.extract_strided_slice %346 {offsets = [0, 0], sizes = [8, 32], strides = [1, 1]} : vector<8x128xf32> to vector<8x32xf32>
    %348 = vector.extract_strided_slice %346 {offsets = [0, 32], sizes = [8, 32], strides = [1, 1]} : vector<8x128xf32> to vector<8x32xf32>
    %349 = vector.extract_strided_slice %346 {offsets = [0, 64], sizes = [8, 32], strides = [1, 1]} : vector<8x128xf32> to vector<8x32xf32>
    %cst_82 = arith.constant 2.000000e+00 : f32
    %350 = vector.broadcast %cst_82 : f32 to vector<8x32xf32>
    %351 = arith.mulf %350, %349 : vector<8x32xf32>
    %cst_83 = arith.constant 1.000000e+00 : f32
    %352 = vector.broadcast %cst_83 : f32 to vector<8x32xf32>
    %353 = arith.subf %351, %352 : vector<8x32xf32>
    %354 = vector.extract_strided_slice %346 {offsets = [0, 96], sizes = [8, 32], strides = [1, 1]} : vector<8x128xf32> to vector<8x32xf32>
    %355 = arith.mulf %348, %311 : vector<8x32xf32>
    %356 = arith.mulf %347, %353 : vector<8x32xf32>
    %357 = arith.addf %355, %356 : vector<8x32xf32>
    %358 = math.tanh %357 : vector<8x32xf32>
    %359 = arith.mulf %354, %358 : vector<8x32xf32>
    %360 = arith.truncf %359 : vector<8x32xf32> to vector<8x32xbf16>
    %cst_84 = arith.constant dense<0.000000e+00> : vector<8x128xf32>
    %361 = tpu.matmul %360, %2, %cst_84 {dimension_numbers = #tpu.dot_dimension_numbers<[1], [0], [0], [1], [0, 0, 1, 1], [], []>} : vector<8x32xbf16>, vector<32x128xbf16>, vector<8x128xf32> -> vector<8x128xf32>
    %362 = arith.truncf %337 : vector<8x32xf32> to vector<8x32xbf16>
    %cst_85 = arith.constant dense<0.000000e+00> : vector<8x128xf32>
    %363 = tpu.matmul %362, %3, %cst_85 {dimension_numbers = #tpu.dot_dimension_numbers<[1], [0], [0], [1], [0, 0, 1, 1], [], []>} : vector<8x32xbf16>, vector<32x128xbf16>, vector<8x128xf32> -> vector<8x128xf32>
    %364 = arith.addf %361, %363 : vector<8x128xf32>
    %365 = arith.addf %364, %7 : vector<8x128xf32>
    %366 = arith.negf %365 : vector<8x128xf32>
    %367 = math.exp %366 : vector<8x128xf32>
    %cst_86 = arith.constant 1.000000e+00 : f32
    %368 = vector.broadcast %cst_86 : f32 to vector<8x128xf32>
    %369 = arith.addf %368, %367 : vector<8x128xf32>
    %370 = arith.divf %368, %369 : vector<8x128xf32>
    %371 = vector.extract_strided_slice %370 {offsets = [0, 0], sizes = [8, 32], strides = [1, 1]} : vector<8x128xf32> to vector<8x32xf32>
    %372 = vector.extract_strided_slice %370 {offsets = [0, 32], sizes = [8, 32], strides = [1, 1]} : vector<8x128xf32> to vector<8x32xf32>
    %373 = vector.extract_strided_slice %370 {offsets = [0, 64], sizes = [8, 32], strides = [1, 1]} : vector<8x128xf32> to vector<8x32xf32>
    %cst_87 = arith.constant 2.000000e+00 : f32
    %374 = vector.broadcast %cst_87 : f32 to vector<8x32xf32>
    %375 = arith.mulf %374, %373 : vector<8x32xf32>
    %cst_88 = arith.constant 1.000000e+00 : f32
    %376 = vector.broadcast %cst_88 : f32 to vector<8x32xf32>
    %377 = arith.subf %375, %376 : vector<8x32xf32>
    %378 = vector.extract_strided_slice %370 {offsets = [0, 96], sizes = [8, 32], strides = [1, 1]} : vector<8x128xf32> to vector<8x32xf32>
    %379 = arith.mulf %372, %335 : vector<8x32xf32>
    %380 = arith.mulf %371, %377 : vector<8x32xf32>
    %381 = arith.addf %379, %380 : vector<8x32xf32>
    %382 = math.tanh %381 : vector<8x32xf32>
    %383 = arith.mulf %378, %382 : vector<8x32xf32>
    %c2 = arith.constant 2 : index
    %c0_89 = arith.constant 0 : index
    %384 = vector.load %arg2[%c2, %c0_89] : memref<8x128xf32, #tpu.memory_space<vmem>>, vector<1x32xf32>
    %c3 = arith.constant 3 : index
    %c0_90 = arith.constant 0 : index
    %385 = vector.load %arg2[%c3, %c0_90] : memref<8x128xf32, #tpu.memory_space<vmem>>, vector<1x1xf32>
    %386 = vector.broadcast %384 : vector<1x32xf32> to vector<8x32xf32>
    %387 = arith.mulf %383, %386 : vector<8x32xf32>
    %cst_91 = arith.constant dense<0.000000e+00> : vector<8xf32>
    %388 = vector.multi_reduction <add>, %387, %cst_91 [1] : vector<8x32xf32> to vector<8xf32>
    %389 = vector.shape_cast %388 : vector<8xf32> to vector<8x1xf32>
    %390 = vector.broadcast %385 : vector<1x1xf32> to vector<8x1xf32>
    %391 = arith.addf %389, %390 : vector<8x1xf32>
    %392 = arith.negf %391 : vector<8x1xf32>
    %393 = math.exp %392 : vector<8x1xf32>
    %cst_92 = arith.constant 1.000000e+00 : f32
    %394 = vector.broadcast %cst_92 : f32 to vector<8x1xf32>
    %395 = arith.addf %394, %393 : vector<8x1xf32>
    %396 = arith.divf %394, %395 : vector<8x1xf32>
    %397 = tpu.concatenate %359, %383, %357, %381 in 1 : vector<8x32xf32>, vector<8x32xf32>, vector<8x32xf32>, vector<8x32xf32> -> vector<8x128xf32>
    %c0_93 = arith.constant 0 : index
    %c0_94 = arith.constant 0 : index
    %398 = vector.load %arg4[%c0_93, %c0_94] : memref<8x256xf32, #tpu.memory_space<vmem>>, vector<8x128xf32>
    tpu.vector_store %arg4[%c0_93, %c0_94], %397 {strides = array<i32>} : memref<8x256xf32, #tpu.memory_space<vmem>>, vector<8x128xf32>,
    %399 = vector.shape_cast %396 : vector<8x1xf32> to vector<8x1xf32>
    %400 = vector.broadcast %399 : vector<8x1xf32> to vector<8x128xf32>
    %c0_95 = arith.constant 0 : index
    %c128 = arith.constant 128 : index
    %401 = vector.load %arg4[%c0_95, %c128] : memref<8x256xf32, #tpu.memory_space<vmem>>, vector<8x128xf32>
    tpu.vector_store %arg4[%c0_95, %c128], %400 {strides = array<i32>} : memref<8x256xf32, #tpu.memory_space<vmem>>, vector<8x128xf32>,
    return
  }
}

</mosaic_0001>

<llo_original>
// kernel: sentiment_lstm_forward.1
$region0: #{sentiment_lstm_forward.1}
  #allocation0 [shape = 'u32[]', space=smem, size = 0x4, offset = 0x4, fixed_abs, tag = 'smem constant byte address 0x4 - core index']
  #allocation1 [shape = 'u32[144,128]{1,0:T(1,128)}', space=vmem, size = 0x12000, scoped, tag = 'internal scratch']
  %s0 = inlined_call_operand.vmem [shape: bf16[64,32], index: 0, kind: input, shape index: {}]
  %s1 = inlined_call_operand.vmem [shape: bf16[128,128], index: 1, kind: input, shape index: {}]
  %s2 = inlined_call_operand.vmem [shape: f32[8,128], index: 2, kind: input, shape index: {}]
  %s3 = inlined_call_operand.vmem [shape: f32[8,128], index: 3, kind: input, shape index: {}]
  %s4 = inlined_call_operand.vmem [shape: f32[8,256], index: 4, kind: output, shape index: {}]
  %s5 = sld [smem:[#allocation0]]
  $region26: #{sentiment_lstm_forward.1} parent=0
    _
  %s7 = ssub.s32 1, %s5
  %s8 = scalar_select 0, %s7, %s5
  // Predicated region
  $region2: #{sentiment_lstm_forward.1} parent=0 // pred_check
    _
  $region3: #{sentiment_lstm_forward.1} parent=0 // pred_check_branch
    %10 = sbr.rel (0) target = $region5
  $region4: #{sentiment_lstm_forward.1} parent=0 // pred_region
    _
  $region5: #{sentiment_lstm_forward.1} parent=0 // pred_fallthru
    _
  // Predicated region
  $region6: #{sentiment_lstm_forward.1} parent=0 // pred_check
    _
  $region7: #{sentiment_lstm_forward.1} parent=0 // pred_check_branch
    %12 = sbr.rel (0) target = $region9
  $region8: #{sentiment_lstm_forward.1} parent=0 // pred_region
    _
  $region9: #{sentiment_lstm_forward.1} parent=0 // pred_fallthru
    _
  // Predicated region
  $region10: #{sentiment_lstm_forward.1} parent=0 // pred_check
    _
  $region11: #{sentiment_lstm_forward.1} parent=0 // pred_check_branch
    %14 = sbr.rel (0) target = $region13
  $region12: #{sentiment_lstm_forward.1} parent=0 // pred_region
    _
  $region13: #{sentiment_lstm_forward.1} parent=0 // pred_fallthru
    _
  // Predicated region
  $region14: #{sentiment_lstm_forward.1} parent=0 // pred_check
    _
  $region15: #{sentiment_lstm_forward.1} parent=0 // pred_check_branch
    %16 = sbr.rel (0) target = $region17
  $region16: #{sentiment_lstm_forward.1} parent=0 // pred_region
    _
  $region17: #{sentiment_lstm_forward.1} parent=0 // pred_fallthru
    _
  %v18 = vld [vmem:[%s1] sm:$0xf]
  %v19 = vld [vmem:[%s1 + $0x4] sm:$0xf]
  %v20 = vld [vmem:[%s1 + $0x8] sm:$0xf]
  %v21 = vld [vmem:[%s1 + $0xc] sm:$0xf]
  %v22 = vld [vmem:[%s1 + $0x10] sm:$0xf]
  %v23 = vld [vmem:[%s1 + $0x14] sm:$0xf]
  %v24 = vld [vmem:[%s1 + $0x18] sm:$0xf]
  %v25 = vld [vmem:[%s1 + $0x1c] sm:$0xf]
  %v26 = vld [vmem:[%s1 + $0x20] sm:$0xf]
  %v27 = vld [vmem:[%s1 + $0x24] sm:$0xf]
  %v28 = vld [vmem:[%s1 + $0x28] sm:$0xf]
  %v29 = vld [vmem:[%s1 + $0x2c] sm:$0xf]
  %v30 = vld [vmem:[%s1 + $0x30] sm:$0xf]
  %v31 = vld [vmem:[%s1 + $0x34] sm:$0xf]
  %v32 = vld [vmem:[%s1 + $0x38] sm:$0xf]
  %v33 = vld [vmem:[%s1 + $0x3c] sm:$0xf]
  %v34 = vld [vmem:[%s2] sm:$0x1]
  %v35 = vld [vmem:[%s2 + $0x1] sm:$0x1]
  %v36 = vlaneseq
  %v37 = vshrl.u32 %v36, 7
  %v38 = vsub.s32 0, %v37
  %v39 = vrot.slane %v35, %v38
  %v40 = vld [vmem:[%s0] sm:$0xf]
  %v41 = vld [vmem:[%s0 + $0x4] sm:$0xf]
  %v42 = vld [vmem:[%s0 + $0x8] sm:$0xf]
  %v43 = vld [vmem:[%s0 + $0xc] sm:$0xf]
  %v44 = vld [vmem:[%s0 + $0x10] sm:$0xf]
  %v45 = vld [vmem:[%s0 + $0x14] sm:$0xf]
  %v46 = vld [vmem:[%s0 + $0x18] sm:$0xf]
  %v47 = vld [vmem:[%s0 + $0x1c] sm:$0xf]
  %v48 = vlaneseq
  %v49 = vshrl.u32 %v48, 7
  %v50 = vsub.s32 0, %v49
  %v51 = vrot.slane %v34, %v50
  %v60 = vunpack.c.l.b16 %v40
  %v61 = vunpack.c.l.b16 %v41
  %v62 = vunpack.c.l.b16 %v42
  %v63 = vunpack.c.l.b16 %v43
  %v64 = vunpack.c.l.b16 %v44
  %v65 = vunpack.c.l.b16 %v45
  %v66 = vunpack.c.l.b16 %v46
  %v67 = vunpack.c.l.b16 %v47
  %v68 = vpack.c.b16 %v61, %v60
  %v69 = vpack.c.b16 %v63, %v62
  %v70 = vpack.c.b16 %v65, %v64
  %v71 = vpack.c.b16 %v67, %v66
  %v76 = vunpack.c.l.b16 %v18
  %v77 = vunpack.c.l.b16 %v19
  %v78 = vunpack.c.l.b16 %v20
  %v79 = vunpack.c.l.b16 %v21
  %v80 = vpack.c.b16 %v77, %v76
  %v81 = vpack.c.b16 %v79, %v78
  %vm84 = vcmask 261120
  %v86 = vsel %vm84, %v68, 0
  %v89 = vsel %vm84, %v69, 0
  %v92 = vsel %vm84, %v70, 0
  %v95 = vsel %vm84, %v71, 0
  %97 = vmatprep.subr.bf16.mxu0 0
  %98 = vmatpush1.bf16.msra.mxu0 %v80
  %99 = vmatprep.subr.bf16.mxu0 0
  %100 = vmatpush1.bf16.msra.mxu0 %v81
  %101 = vmatprep.subr.bf16.mxu0 0
  %102 = vmatpush1.bf16.msra.mxu0 0
  %103 = vmatprep.subr.bf16.mxu0 0
  %104 = vmatpush1.bf16.msra.mxu0 0
  %105 = vmatprep.subr.bf16.mxu0 0
  %106 = vmatpush1.bf16.msra.mxu0 0
  %107 = vmatprep.subr.bf16.mxu0 0
  %108 = vmatpush1.bf16.msra.mxu0 0
  %109 = vmatprep.subr.bf16.mxu0 0
  %110 = vmatpush1.bf16.msra.mxu0 0
  %111 = vmatprep.subr.bf16.mxu0 0
  %112 = vmatpush1.bf16.msra.mxu0 0
  %113 = vmatprep.subr.bf16.mxu0 0
  %114 = vmatpush1.bf16.msra.mxu0 0
  %115 = vmatprep.subr.bf16.mxu0 0
  %116 = vmatpush1.bf16.msra.mxu0 0
  %117 = vmatprep.subr.bf16.mxu0 0
  %118 = vmatpush1.bf16.msra.mxu0 0
  %119 = vmatprep.subr.bf16.mxu0 0
  %120 = vmatpush1.bf16.msra.mxu0 0
  %121 = vmatprep.subr.bf16.mxu0 0
  %122 = vmatpush1.bf16.msra.mxu0 0
  %123 = vmatprep.subr.bf16.mxu0 0
  %124 = vmatpush1.bf16.msra.mxu0 0
  %125 = vmatprep.subr.bf16.mxu0 0
  %126 = vmatpush1.bf16.msra.mxu0 0
  %127 = vmatprep.subr.bf16.mxu0 0
  %128 = vmatpush1.bf16.msra.mxu0 0
  %129 = vmatprep.mubr.bf16.mxu0 0
  %130 = vmatmul.mubr.bf16.gmra.mrb[0].mxu0 %v86
  %v131 = vpop.f32.mrb[0].mxu0
  %v132 = vadd.f32 %v51, %v131
  %v133 = vpop.f32.mrb[0].mxu0
  %v134 = vpop.f32.mrb[0].mxu0
  %v135 = vadd.f32 %v51, %v134
  %v136 = vpop.f32.mrb[0].mxu0
  %137 = vmatprep.mubr.bf16.mxu0 0
  %138 = vmatmul.mubr.bf16.gmra.mrb[0].mxu0 %v89
  %v139 = vpop.f32.mrb[0].mxu0
  %v140 = vadd.f32 %v51, %v139
  %v141 = vpop.f32.mrb[0].mxu0
  %v142 = vpop.f32.mrb[0].mxu0
  %v143 = vadd.f32 %v51, %v142
  %v144 = vpop.f32.mrb[0].mxu0
  %145 = vmatprep.mubr.bf16.mxu0 0
  %146 = vmatmul.mubr.bf16.gmra.mrb[0].mxu0 %v92
  %v147 = vpop.f32.mrb[0].mxu0
  %v148 = vadd.f32 %v51, %v147
  %v149 = vpop.f32.mrb[0].mxu0
  %v150 = vpop.f32.mrb[0].mxu0
  %v151 = vadd.f32 %v51, %v150
  %v152 = vpop.f32.mrb[0].mxu0
  %153 = vmatprep.mubr.bf16.mxu0 0
  %154 = vmatmul.mubr.bf16.gmra.mrb[0].mxu0 %v95
  %v155 = vpop.f32.mrb[0].mxu0
  %v156 = vadd.f32 %v51, %v155
  %v157 = vpop.f32.mrb[0].mxu0
  %v158 = vpop.f32.mrb[0].mxu0
  %v159 = vadd.f32 %v51, %v158
  %v160 = vpop.f32.mrb[0].mxu0
  %161 = vdwg.mxu0
  %v162 = vld [vmem:[%s3] sm:$0xff]
  %v163 = vpack.c.bf16 %v162, %v162
  %v168 = vunpack.c.l.b16 %v22
  %v169 = vunpack.c.l.b16 %v23
  %v170 = vunpack.c.l.b16 %v24
  %v171 = vunpack.c.l.b16 %v25
  %v172 = vpack.c.b16 %v169, %v168
  %v173 = vpack.c.b16 %v171, %v170
  %v177 = vsel %vm84, %v163, 0
  %179 = vmatprep.subr.bf16.mxu0 0
  %180 = vmatpush1.bf16.msra.mxu0 %v172
  %181 = vmatprep.subr.bf16.mxu0 0
  %182 = vmatpush1.bf16.msra.mxu0 %v173
  %183 = vmatprep.subr.bf16.mxu0 0
  %184 = vmatpush1.bf16.msra.mxu0 0
  %185 = vmatprep.subr.bf16.mxu0 0
  %186 = vmatpush1.bf16.msra.mxu0 0
  %187 = vmatprep.subr.bf16.mxu0 0
  %188 = vmatpush1.bf16.msra.mxu0 0
  %189 = vmatprep.subr.bf16.mxu0 0
  %190 = vmatpush1.bf16.msra.mxu0 0
  %191 = vmatprep.subr.bf16.mxu0 0
  %192 = vmatpush1.bf16.msra.mxu0 0
  %193 = vmatprep.subr.bf16.mxu0 0
  %194 = vmatpush1.bf16.msra.mxu0 0
  %195 = vmatprep.subr.bf16.mxu0 0
  %196 = vmatpush1.bf16.msra.mxu0 0
  %197 = vmatprep.subr.bf16.mxu0 0
  %198 = vmatpush1.bf16.msra.mxu0 0
  %199 = vmatprep.subr.bf16.mxu0 0
  %200 = vmatpush1.bf16.msra.mxu0 0
  %201 = vmatprep.subr.bf16.mxu0 0
  %202 = vmatpush1.bf16.msra.mxu0 0
  %203 = vmatprep.subr.bf16.mxu0 0
  %204 = vmatpush1.bf16.msra.mxu0 0
  %205 = vmatprep.subr.bf16.mxu0 0
  %206 = vmatpush1.bf16.msra.mxu0 0
  %207 = vmatprep.subr.bf16.mxu0 0
  %208 = vmatpush1.bf16.msra.mxu0 0
  %209 = vmatprep.subr.bf16.mxu0 0
  %210 = vmatpush1.bf16.msra.mxu0 0
  %211 = vmatprep.mubr.bf16.mxu0 0
  %212 = vmatmul.mubr.bf16.gmra.mrb[0].mxu0 %v177
  %v213 = vpop.f32.mrb[0].mxu0
  %v214 = vadd.f32 0.0, %v213
  %v215 = vpop.f32.mrb[0].mxu0
  %v216 = vpop.f32.mrb[0].mxu0
  %v217 = vpop.f32.mrb[0].mxu0
  %218 = vdwg.mxu0
  %v219 = vadd.f32 %v132, %v214
  %v220 = vxor.u32 %v219, 2147483648
  %v221 = vmul.f32 %v220, 1.442695
  %v222 = vpow.pop %v221
  %v223 = vadd.f32 %v222, 1.0
  %v224 = vrcp.pop %v223
  %v225 = vmul.f32 1.0, %v224
  %v226 = vmul.f32 %v225, 2.0
  %v227 = vsub.f32 %v226, 1.0
  %229 = vrot.lane.b32.xlu0 %v162, 96
  %v230 = vpop.permute.xlu0 %229
  %v232 = vmul.f32 %v225, %v230
  %234 = vrot.lane.b32.xlu0 %v227, 64
  %v235 = vpop.permute.xlu0 %234
  %v237 = vmul.f32 %v225, %v235
  %239 = vrot.lane.b32.xlu0 %v237, 32
  %v240 = vpop.permute.xlu0 %239
  %v242 = vadd.f32 %v232, %v240
  %v243 = vtanh.pop %v242
  %245 = vrot.lane.b32.xlu0 %v243, 64
  %v246 = vpop.permute.xlu0 %245
  %v248 = vmul.f32 %v225, %v246
  %v249 = vpack.c.bf16 %v248, %v248
  %251 = vrot.lane.b32.xlu0 %v163, 96
  %v252 = vpop.permute.xlu0 %251
  %v257 = vunpack.c.l.b16 %v30
  %v258 = vunpack.c.l.b16 %v31
  %v259 = vunpack.c.l.b16 %v32
  %v260 = vunpack.c.l.b16 %v33
  %v261 = vpack.c.b16 %v258, %v257
  %v262 = vpack.c.b16 %v260, %v259
  %v266 = vsel %vm84, %v252, 0
  %268 = vmatprep.subr.bf16.mxu0 0
  %269 = vmatpush1.bf16.msra.mxu0 %v261
  %270 = vmatprep.subr.bf16.mxu0 0
  %271 = vmatpush1.bf16.msra.mxu0 %v262
  %272 = vmatprep.subr.bf16.mxu0 0
  %273 = vmatpush1.bf16.msra.mxu0 0
  %274 = vmatprep.subr.bf16.mxu0 0
  %275 = vmatpush1.bf16.msra.mxu0 0
  %276 = vmatprep.subr.bf16.mxu0 0
  %277 = vmatpush1.bf16.msra.mxu0 0
  %278 = vmatprep.subr.bf16.mxu0 0
  %279 = vmatpush1.bf16.msra.mxu0 0
  %280 = vmatprep.subr.bf16.mxu0 0
  %281 = vmatpush1.bf16.msra.mxu0 0
  %282 = vmatprep.subr.bf16.mxu0 0
  %283 = vmatpush1.bf16.msra.mxu0 0
  %284 = vmatprep.subr.bf16.mxu0 0
  %285 = vmatpush1.bf16.msra.mxu0 0
  %286 = vmatprep.subr.bf16.mxu0 0
  %287 = vmatpush1.bf16.msra.mxu0 0
  %288 = vmatprep.subr.bf16.mxu0 0
  %289 = vmatpush1.bf16.msra.mxu0 0
  %290 = vmatprep.subr.bf16.mxu0 0
  %291 = vmatpush1.bf16.msra.mxu0 0
  %292 = vmatprep.subr.bf16.mxu0 0
  %293 = vmatpush1.bf16.msra.mxu0 0
  %294 = vmatprep.subr.bf16.mxu0 0
  %295 = vmatpush1.bf16.msra.mxu0 0
  %296 = vmatprep.subr.bf16.mxu0 0
  %297 = vmatpush1.bf16.msra.mxu0 0
  %298 = vmatprep.subr.bf16.mxu0 0
  %299 = vmatpush1.bf16.msra.mxu0 0
  %300 = vmatprep.mubr.bf16.mxu0 0
  %301 = vmatmul.mubr.bf16.gmra.mrb[0].mxu0 %v266
  %v302 = vpop.f32.mrb[0].mxu0
  %v303 = vadd.f32 0.0, %v302
  %v304 = vpop.f32.mrb[0].mxu0
  %v305 = vpop.f32.mrb[0].mxu0
  %v306 = vpop.f32.mrb[0].mxu0
  %307 = vdwg.mxu0
  %309 = vrot.lane.b32.xlu0 %v249, 32
  %v310 = vpop.permute.xlu0 %309
  %v315 = vunpack.c.l.b16 %v26
  %v316 = vunpack.c.l.b16 %v27
  %v317 = vunpack.c.l.b16 %v28
  %v318 = vunpack.c.l.b16 %v29
  %v319 = vpack.c.b16 %v316, %v315
  %v320 = vpack.c.b16 %v318, %v317
  %v324 = vsel %vm84, %v310, 0
  %326 = vmatprep.subr.bf16.mxu0 0
  %327 = vmatpush1.bf16.msra.mxu0 %v319
  %328 = vmatprep.subr.bf16.mxu0 0
  %329 = vmatpush1.bf16.msra.mxu0 %v320
  %330 = vmatprep.subr.bf16.mxu0 0
  %331 = vmatpush1.bf16.msra.mxu0 0
  %332 = vmatprep.subr.bf16.mxu0 0
  %333 = vmatpush1.bf16.msra.mxu0 0
  %334 = vmatprep.subr.bf16.mxu0 0
  %335 = vmatpush1.bf16.msra.mxu0 0
  %336 = vmatprep.subr.bf16.mxu0 0
  %337 = vmatpush1.bf16.msra.mxu0 0
  %338 = vmatprep.subr.bf16.mxu0 0
  %339 = vmatpush1.bf16.msra.mxu0 0
  %340 = vmatprep.subr.bf16.mxu0 0
  %341 = vmatpush1.bf16.msra.mxu0 0
  %342 = vmatprep.subr.bf16.mxu0 0
  %343 = vmatpush1.bf16.msra.mxu0 0
  %344 = vmatprep.subr.bf16.mxu0 0
  %345 = vmatpush1.bf16.msra.mxu0 0
  %346 = vmatprep.subr.bf16.mxu0 0
  %347 = vmatpush1.bf16.msra.mxu0 0
  %348 = vmatprep.subr.bf16.mxu0 0
  %349 = vmatpush1.bf16.msra.mxu0 0
  %350 = vmatprep.subr.bf16.mxu0 0
  %351 = vmatpush1.bf16.msra.mxu0 0
  %352 = vmatprep.subr.bf16.mxu0 0
  %353 = vmatpush1.bf16.msra.mxu0 0
  %354 = vmatprep.subr.bf16.mxu0 0
  %355 = vmatpush1.bf16.msra.mxu0 0
  %356 = vmatprep.subr.bf16.mxu0 0
  %357 = vmatpush1.bf16.msra.mxu0 0
  %358 = vmatprep.mubr.bf16.mxu0 0
  %359 = vmatmul.mubr.bf16.gmra.mrb[0].mxu0 %v324
  %v360 = vpop.f32.mrb[0].mxu0
  %v361 = vadd.f32 %v303, %v360
  %v362 = vpop.f32.mrb[0].mxu0
  %v363 = vpop.f32.mrb[0].mxu0
  %v364 = vpop.f32.mrb[0].mxu0
  %365 = vdwg.mxu0
  %v366 = vadd.f32 %v361, %v39
  %v367 = vxor.u32 %v366, 2147483648
  %v368 = vmul.f32 %v367, 1.442695
  %v369 = vpow.pop %v368
  %v370 = vadd.f32 %v369, 1.0
  %v371 = vrcp.pop %v370
  %v372 = vmul.f32 1.0, %v371
  %v373 = vmul.f32 %v372, 2.0
  %v374 = vsub.f32 %v373, 1.0
  %375 = vrot.lane.b32.xlu0 %v162, 64
  %v376 = vpop.permute.xlu0 %375
  %v378 = vmul.f32 %v372, %v376
  %380 = vrot.lane.b32.xlu0 %v374, 64
  %v381 = vpop.permute.xlu0 %380
  %v383 = vmul.f32 %v372, %v381
  %385 = vrot.lane.b32.xlu0 %v383, 32
  %v386 = vpop.permute.xlu0 %385
  %v388 = vadd.f32 %v378, %v386
  %v389 = vtanh.pop %v388
  %391 = vrot.lane.b32.xlu0 %v389, 64
  %v392 = vpop.permute.xlu0 %391
  %v394 = vmul.f32 %v372, %v392
  %395 = vmatprep.subr.bf16.mxu0 0
  %396 = vmatpush1.bf16.msra.mxu0 %v172
  %397 = vmatprep.subr.bf16.mxu0 0
  %398 = vmatpush1.bf16.msra.mxu0 %v173
  %399 = vmatprep.subr.bf16.mxu0 0
  %400 = vmatpush1.bf16.msra.mxu0 0
  %401 = vmatprep.subr.bf16.mxu0 0
  %402 = vmatpush1.bf16.msra.mxu0 0
  %403 = vmatprep.subr.bf16.mxu0 0
  %404 = vmatpush1.bf16.msra.mxu0 0
  %405 = vmatprep.subr.bf16.mxu0 0
  %406 = vmatpush1.bf16.msra.mxu0 0
  %407 = vmatprep.subr.bf16.mxu0 0
  %408 = vmatpush1.bf16.msra.mxu0 0
  %409 = vmatprep.subr.bf16.mxu0 0
  %410 = vmatpush1.bf16.msra.mxu0 0
  %411 = vmatprep.subr.bf16.mxu0 0
  %412 = vmatpush1.bf16.msra.mxu0 0
  %413 = vmatprep.subr.bf16.mxu0 0
  %414 = vmatpush1.bf16.msra.mxu0 0
  %415 = vmatprep.subr.bf16.mxu0 0
  %416 = vmatpush1.bf16.msra.mxu0 0
  %417 = vmatprep.subr.bf16.mxu0 0
  %418 = vmatpush1.bf16.msra.mxu0 0
  %419 = vmatprep.subr.bf16.mxu0 0
  %420 = vmatpush1.bf16.msra.mxu0 0
  %421 = vmatprep.subr.bf16.mxu0 0
  %422 = vmatpush1.bf16.msra.mxu0 0
  %423 = vmatprep.subr.bf16.mxu0 0
  %424 = vmatpush1.bf16.msra.mxu0 0
  %425 = vmatprep.subr.bf16.mxu0 0
  %426 = vmatpush1.bf16.msra.mxu0 0
  %427 = vmatprep.mubr.bf16.mxu0 0
  %428 = vmatmul.mubr.bf16.gmra.mrb[0].mxu0 %v324
  %v429 = vpop.f32.mrb[0].mxu0
  %v430 = vadd.f32 0.0, %v429
  %v431 = vpop.f32.mrb[0].mxu0
  %v432 = vpop.f32.mrb[0].mxu0
  %v433 = vpop.f32.mrb[0].mxu0
  %434 = vdwg.mxu0
  %v435 = vadd.f32 %v135, %v430
  %v436 = vxor.u32 %v435, 2147483648
  %v437 = vmul.f32 %v436, 1.442695
  %v438 = vpow.pop %v437
  %v439 = vadd.f32 %v438, 1.0
  %v440 = vrcp.pop %v439
  %v441 = vmul.f32 1.0, %v440
  %v442 = vmul.f32 %v441, 2.0
  %v443 = vsub.f32 %v442, 1.0
  %v444 = vmul.f32 %v441, %v242
  %446 = vrot.lane.b32.xlu0 %v443, 64
  %v447 = vpop.permute.xlu0 %446
  %v449 = vmul.f32 %v441, %v447
  %451 = vrot.lane.b32.xlu0 %v449, 32
  %v452 = vpop.permute.xlu0 %451
  %v454 = vadd.f32 %v444, %v452
  %v455 = vtanh.pop %v454
  %457 = vrot.lane.b32.xlu0 %v455, 64
  %v458 = vpop.permute.xlu0 %457
  %v460 = vmul.f32 %v441, %v458
  %v461 = vpack.c.bf16 %v460, %v460
  %v462 = vpack.c.bf16 %v394, %v394
  %464 = vrot.lane.b32.xlu0 %v462, 32
  %v465 = vpop.permute.xlu0 %464
  %v467 = vsel %vm84, %v465, 0
  %469 = vmatprep.subr.bf16.mxu0 0
  %470 = vmatpush1.bf16.msra.mxu0 %v261
  %471 = vmatprep.subr.bf16.mxu0 0
  %472 = vmatpush1.bf16.msra.mxu0 %v262
  %473 = vmatprep.subr.bf16.mxu0 0
  %474 = vmatpush1.bf16.msra.mxu0 0
  %475 = vmatprep.subr.bf16.mxu0 0
  %476 = vmatpush1.bf16.msra.mxu0 0
  %477 = vmatprep.subr.bf16.mxu0 0
  %478 = vmatpush1.bf16.msra.mxu0 0
  %479 = vmatprep.subr.bf16.mxu0 0
  %480 = vmatpush1.bf16.msra.mxu0 0
  %481 = vmatprep.subr.bf16.mxu0 0
  %482 = vmatpush1.bf16.msra.mxu0 0
  %483 = vmatprep.subr.bf16.mxu0 0
  %484 = vmatpush1.bf16.msra.mxu0 0
  %485 = vmatprep.subr.bf16.mxu0 0
  %486 = vmatpush1.bf16.msra.mxu0 0
  %487 = vmatprep.subr.bf16.mxu0 0
  %488 = vmatpush1.bf16.msra.mxu0 0
  %489 = vmatprep.subr.bf16.mxu0 0
  %490 = vmatpush1.bf16.msra.mxu0 0
  %491 = vmatprep.subr.bf16.mxu0 0
  %492 = vmatpush1.bf16.msra.mxu0 0
  %493 = vmatprep.subr.bf16.mxu0 0
  %494 = vmatpush1.bf16.msra.mxu0 0
  %495 = vmatprep.subr.bf16.mxu0 0
  %496 = vmatpush1.bf16.msra.mxu0 0
  %497 = vmatprep.subr.bf16.mxu0 0
  %498 = vmatpush1.bf16.msra.mxu0 0
  %499 = vmatprep.subr.bf16.mxu0 0
  %500 = vmatpush1.bf16.msra.mxu0 0
  %501 = vmatprep.mubr.bf16.mxu0 0
  %502 = vmatmul.mubr.bf16.gmra.mrb[0].mxu0 %v467
  %v503 = vpop.f32.mrb[0].mxu0
  %v504 = vadd.f32 0.0, %v503
  %v505 = vpop.f32.mrb[0].mxu0
  %v506 = vpop.f32.mrb[0].mxu0
  %v507 = vpop.f32.mrb[0].mxu0
  %508 = vdwg.mxu0
  %510 = vrot.lane.b32.xlu0 %v461, 32
  %v511 = vpop.permute.xlu0 %510
  %v513 = vsel %vm84, %v511, 0
  %515 = vmatprep.subr.bf16.mxu0 0
  %516 = vmatpush1.bf16.msra.mxu0 %v319
  %517 = vmatprep.subr.bf16.mxu0 0
  %518 = vmatpush1.bf16.msra.mxu0 %v320
  %519 = vmatprep.subr.bf16.mxu0 0
  %520 = vmatpush1.bf16.msra.mxu0 0
  %521 = vmatprep.subr.bf16.mxu0 0
  %522 = vmatpush1.bf16.msra.mxu0 0
  %523 = vmatprep.subr.bf16.mxu0 0
  %524 = vmatpush1.bf16.msra.mxu0 0
  %525 = vmatprep.subr.bf16.mxu0 0
  %526 = vmatpush1.bf16.msra.mxu0 0
  %527 = vmatprep.subr.bf16.mxu0 0
  %528 = vmatpush1.bf16.msra.mxu0 0
  %529 = vmatprep.subr.bf16.mxu0 0
  %530 = vmatpush1.bf16.msra.mxu0 0
  %531 = vmatprep.subr.bf16.mxu0 0
  %532 = vmatpush1.bf16.msra.mxu0 0
  %533 = vmatprep.subr.bf16.mxu0 0
  %534 = vmatpush1.bf16.msra.mxu0 0
  %535 = vmatprep.subr.bf16.mxu0 0
  %536 = vmatpush1.bf16.msra.mxu0 0
  %537 = vmatprep.subr.bf16.mxu0 0
  %538 = vmatpush1.bf16.msra.mxu0 0
  %539 = vmatprep.subr.bf16.mxu0 0
  %540 = vmatpush1.bf16.msra.mxu0 0
  %541 = vmatprep.subr.bf16.mxu0 0
  %542 = vmatpush1.bf16.msra.mxu0 0
  %543 = vmatprep.subr.bf16.mxu0 0
  %544 = vmatpush1.bf16.msra.mxu0 0
  %545 = vmatprep.subr.bf16.mxu0 0
  %546 = vmatpush1.bf16.msra.mxu0 0
  %547 = vmatprep.mubr.bf16.mxu0 0
  %548 = vmatmul.mubr.bf16.gmra.mrb[0].mxu0 %v513
  %v549 = vpop.f32.mrb[0].mxu0
  %v550 = vadd.f32 %v504, %v549
  %v551 = vpop.f32.mrb[0].mxu0
  %v552 = vpop.f32.mrb[0].mxu0
  %v553 = vpop.f32.mrb[0].mxu0
  %554 = vdwg.mxu0
  %v555 = vadd.f32 %v550, %v39
  %v556 = vxor.u32 %v555, 2147483648
  %v557 = vmul.f32 %v556, 1.442695
  %v558 = vpow.pop %v557
  %v559 = vadd.f32 %v558, 1.0
  %v560 = vrcp.pop %v559
  %v561 = vmul.f32 1.0, %v560
  %v562 = vmul.f32 %v561, 2.0
  %v563 = vsub.f32 %v562, 1.0
  %v564 = vmul.f32 %v561, %v388
  %566 = vrot.lane.b32.xlu0 %v563, 64
  %v567 = vpop.permute.xlu0 %566
  %v569 = vmul.f32 %v561, %v567
  %571 = vrot.lane.b32.xlu0 %v569, 32
  %v572 = vpop.permute.xlu0 %571
  %v574 = vadd.f32 %v564, %v572
  %v575 = vtanh.pop %v574
  %577 = vrot.lane.b32.xlu0 %v575, 64
  %v578 = vpop.permute.xlu0 %577
  %v580 = vmul.f32 %v561, %v578
  %581 = vmatprep.subr.bf16.mxu0 0
  %582 = vmatpush1.bf16.msra.mxu0 %v172
  %583 = vmatprep.subr.bf16.mxu0 0
  %584 = vmatpush1.bf16.msra.mxu0 %v173
  %585 = vmatprep.subr.bf16.mxu0 0
  %586 = vmatpush1.bf16.msra.mxu0 0
  %587 = vmatprep.subr.bf16.mxu0 0
  %588 = vmatpush1.bf16.msra.mxu0 0
  %589 = vmatprep.subr.bf16.mxu0 0
  %590 = vmatpush1.bf16.msra.mxu0 0
  %591 = vmatprep.subr.bf16.mxu0 0
  %592 = vmatpush1.bf16.msra.mxu0 0
  %593 = vmatprep.subr.bf16.mxu0 0
  %594 = vmatpush1.bf16.msra.mxu0 0
  %595 = vmatprep.subr.bf16.mxu0 0
  %596 = vmatpush1.bf16.msra.mxu0 0
  %597 = vmatprep.subr.bf16.mxu0 0
  %598 = vmatpush1.bf16.msra.mxu0 0
  %599 = vmatprep.subr.bf16.mxu0 0
  %600 = vmatpush1.bf16.msra.mxu0 0
  %601 = vmatprep.subr.bf16.mxu0 0
  %602 = vmatpush1.bf16.msra.mxu0 0
  %603 = vmatprep.subr.bf16.mxu0 0
  %604 = vmatpush1.bf16.msra.mxu0 0
  %605 = vmatprep.subr.bf16.mxu0 0
  %606 = vmatpush1.bf16.msra.mxu0 0
  %607 = vmatprep.subr.bf16.mxu0 0
  %608 = vmatpush1.bf16.msra.mxu0 0
  %609 = vmatprep.subr.bf16.mxu0 0
  %610 = vmatpush1.bf16.msra.mxu0 0
  %611 = vmatprep.subr.bf16.mxu0 0
  %612 = vmatpush1.bf16.msra.mxu0 0
  %613 = vmatprep.mubr.bf16.mxu0 0
  %614 = vmatmul.mubr.bf16.gmra.mrb[0].mxu0 %v513
  %v615 = vpop.f32.mrb[0].mxu0
  %v616 = vadd.f32 0.0, %v615
  %v617 = vpop.f32.mrb[0].mxu0
  %v618 = vpop.f32.mrb[0].mxu0
  %v619 = vpop.f32.mrb[0].mxu0
  %620 = vdwg.mxu0
  %v621 = vadd.f32 %v140, %v616
  %v622 = vxor.u32 %v621, 2147483648
  %v623 = vmul.f32 %v622, 1.442695
  %v624 = vpow.pop %v623
  %v625 = vadd.f32 %v624, 1.0
  %v626 = vrcp.pop %v625
  %v627 = vmul.f32 1.0, %v626
  %v628 = vmul.f32 %v627, 2.0
  %v629 = vsub.f32 %v628, 1.0
  %v630 = vmul.f32 %v627, %v454
  %632 = vrot.lane.b32.xlu0 %v629, 64
  %v633 = vpop.permute.xlu0 %632
  %v635 = vmul.f32 %v627, %v633
  %637 = vrot.lane.b32.xlu0 %v635, 32
  %v638 = vpop.permute.xlu0 %637
  %v640 = vadd.f32 %v630, %v638
  %v641 = vtanh.pop %v640
  %643 = vrot.lane.b32.xlu0 %v641, 64
  %v644 = vpop.permute.xlu0 %643
  %v646 = vmul.f32 %v627, %v644
  %v647 = vpack.c.bf16 %v646, %v646
  %v648 = vpack.c.bf16 %v580, %v580
  %650 = vrot.lane.b32.xlu0 %v648, 32
  %v651 = vpop.permute.xlu0 %650
  %v653 = vsel %vm84, %v651, 0
  %655 = vmatprep.subr.bf16.mxu0 0
  %656 = vmatpush1.bf16.msra.mxu0 %v261
  %657 = vmatprep.subr.bf16.mxu0 0
  %658 = vmatpush1.bf16.msra.mxu0 %v262
  %659 = vmatprep.subr.bf16.mxu0 0
  %660 = vmatpush1.bf16.msra.mxu0 0
  %661 = vmatprep.subr.bf16.mxu0 0
  %662 = vmatpush1.bf16.msra.mxu0 0
  %663 = vmatprep.subr.bf16.mxu0 0
  %664 = vmatpush1.bf16.msra.mxu0 0
  %665 = vmatprep.subr.bf16.mxu0 0
  %666 = vmatpush1.bf16.msra.mxu0 0
  %667 = vmatprep.subr.bf16.mxu0 0
  %668 = vmatpush1.bf16.msra.mxu0 0
  %669 = vmatprep.subr.bf16.mxu0 0
  %670 = vmatpush1.bf16.msra.mxu0 0
  %671 = vmatprep.subr.bf16.mxu0 0
  %672 = vmatpush1.bf16.msra.mxu0 0
  %673 = vmatprep.subr.bf16.mxu0 0
  %674 = vmatpush1.bf16.msra.mxu0 0
  %675 = vmatprep.subr.bf16.mxu0 0
  %676 = vmatpush1.bf16.msra.mxu0 0
  %677 = vmatprep.subr.bf16.mxu0 0
  %678 = vmatpush1.bf16.msra.mxu0 0
  %679 = vmatprep.subr.bf16.mxu0 0
  %680 = vmatpush1.bf16.msra.mxu0 0
  %681 = vmatprep.subr.bf16.mxu0 0
  %682 = vmatpush1.bf16.msra.mxu0 0
  %683 = vmatprep.subr.bf16.mxu0 0
  %684 = vmatpush1.bf16.msra.mxu0 0
  %685 = vmatprep.subr.bf16.mxu0 0
  %686 = vmatpush1.bf16.msra.mxu0 0
  %687 = vmatprep.mubr.bf16.mxu0 0
  %688 = vmatmul.mubr.bf16.gmra.mrb[0].mxu0 %v653
  %v689 = vpop.f32.mrb[0].mxu0
  %v690 = vadd.f32 0.0, %v689
  %v691 = vpop.f32.mrb[0].mxu0
  %v692 = vpop.f32.mrb[0].mxu0
  %v693 = vpop.f32.mrb[0].mxu0
  %694 = vdwg.mxu0
  %696 = vrot.lane.b32.xlu0 %v647, 32
  %v697 = vpop.permute.xlu0 %696
  %v699 = vsel %vm84, %v697, 0
  %701 = vmatprep.subr.bf16.mxu0 0
  %702 = vmatpush1.bf16.msra.mxu0 %v319
  %703 = vmatprep.subr.bf16.mxu0 0
  %704 = vmatpush1.bf16.msra.mxu0 %v320
  %705 = vmatprep.subr.bf16.mxu0 0
  %706 = vmatpush1.bf16.msra.mxu0 0
  %707 = vmatprep.subr.bf16.mxu0 0
  %708 = vmatpush1.bf16.msra.mxu0 0
  %709 = vmatprep.subr.bf16.mxu0 0
  %710 = vmatpush1.bf16.msra.mxu0 0
  %711 = vmatprep.subr.bf16.mxu0 0
  %712 = vmatpush1.bf16.msra.mxu0 0
  %713 = vmatprep.subr.bf16.mxu0 0
  %714 = vmatpush1.bf16.msra.mxu0 0
  %715 = vmatprep.subr.bf16.mxu0 0
  %716 = vmatpush1.bf16.msra.mxu0 0
  %717 = vmatprep.subr.bf16.mxu0 0
  %718 = vmatpush1.bf16.msra.mxu0 0
  %719 = vmatprep.subr.bf16.mxu0 0
  %720 = vmatpush1.bf16.msra.mxu0 0
  %721 = vmatprep.subr.bf16.mxu0 0
  %722 = vmatpush1.bf16.msra.mxu0 0
  %723 = vmatprep.subr.bf16.mxu0 0
  %724 = vmatpush1.bf16.msra.mxu0 0
  %725 = vmatprep.subr.bf16.mxu0 0
  %726 = vmatpush1.bf16.msra.mxu0 0
  %727 = vmatprep.subr.bf16.mxu0 0
  %728 = vmatpush1.bf16.msra.mxu0 0
  %729 = vmatprep.subr.bf16.mxu0 0
  %730 = vmatpush1.bf16.msra.mxu0 0
  %731 = vmatprep.subr.bf16.mxu0 0
  %732 = vmatpush1.bf16.msra.mxu0 0
  %733 = vmatprep.mubr.bf16.mxu0 0
  %734 = vmatmul.mubr.bf16.gmra.mrb[0].mxu0 %v699
  %v735 = vpop.f32.mrb[0].mxu0
  %v736 = vadd.f32 %v690, %v735
  %v737 = vpop.f32.mrb[0].mxu0
  %v738 = vpop.f32.mrb[0].mxu0
  %v739 = vpop.f32.mrb[0].mxu0
  %740 = vdwg.mxu0
  %v741 = vadd.f32 %v736, %v39
  %v742 = vxor.u32 %v741, 2147483648
  %v743 = vmul.f32 %v742, 1.442695
  %v744 = vpow.pop %v743
  %v745 = vadd.f32 %v744, 1.0
  %v746 = vrcp.pop %v745
  %v747 = vmul.f32 1.0, %v746
  %v748 = vmul.f32 %v747, 2.0
  %v749 = vsub.f32 %v748, 1.0
  %v750 = vmul.f32 %v747, %v574
  %752 = vrot.lane.b32.xlu0 %v749, 64
  %v753 = vpop.permute.xlu0 %752
  %v755 = vmul.f32 %v747, %v753
  %757 = vrot.lane.b32.xlu0 %v755, 32
  %v758 = vpop.permute.xlu0 %757
  %v760 = vadd.f32 %v750, %v758
  %v761 = vtanh.pop %v760
  %763 = vrot.lane.b32.xlu0 %v761, 64
  %v764 = vpop.permute.xlu0 %763
  %v766 = vmul.f32 %v747, %v764
  %767 = vmatprep.subr.bf16.mxu0 0
  %768 = vmatpush1.bf16.msra.mxu0 %v172
  %769 = vmatprep.subr.bf16.mxu0 0
  %770 = vmatpush1.bf16.msra.mxu0 %v173
  %771 = vmatprep.subr.bf16.mxu0 0
  %772 = vmatpush1.bf16.msra.mxu0 0
  %773 = vmatprep.subr.bf16.mxu0 0
  %774 = vmatpush1.bf16.msra.mxu0 0
  %775 = vmatprep.subr.bf16.mxu0 0
  %776 = vmatpush1.bf16.msra.mxu0 0
  %777 = vmatprep.subr.bf16.mxu0 0
  %778 = vmatpush1.bf16.msra.mxu0 0
  %779 = vmatprep.subr.bf16.mxu0 0
  %780 = vmatpush1.bf16.msra.mxu0 0
  %781 = vmatprep.subr.bf16.mxu0 0
  %782 = vmatpush1.bf16.msra.mxu0 0
  %783 = vmatprep.subr.bf16.mxu0 0
  %784 = vmatpush1.bf16.msra.mxu0 0
  %785 = vmatprep.subr.bf16.mxu0 0
  %786 = vmatpush1.bf16.msra.mxu0 0
  %787 = vmatprep.subr.bf16.mxu0 0
  %788 = vmatpush1.bf16.msra.mxu0 0
  %789 = vmatprep.subr.bf16.mxu0 0
  %790 = vmatpush1.bf16.msra.mxu0 0
  %791 = vmatprep.subr.bf16.mxu0 0
  %792 = vmatpush1.bf16.msra.mxu0 0
  %793 = vmatprep.subr.bf16.mxu0 0
  %794 = vmatpush1.bf16.msra.mxu0 0
  %795 = vmatprep.subr.bf16.mxu0 0
  %796 = vmatpush1.bf16.msra.mxu0 0
  %797 = vmatprep.subr.bf16.mxu0 0
  %798 = vmatpush1.bf16.msra.mxu0 0
  %799 = vmatprep.mubr.bf16.mxu0 0
  %800 = vmatmul.mubr.bf16.gmra.mrb[0].mxu0 %v699
  %v801 = vpop.f32.mrb[0].mxu0
  %v802 = vadd.f32 0.0, %v801
  %v803 = vpop.f32.mrb[0].mxu0
  %v804 = vpop.f32.mrb[0].mxu0
  %v805 = vpop.f32.mrb[0].mxu0
  %806 = vdwg.mxu0
  %v807 = vadd.f32 %v143, %v802
  %v808 = vxor.u32 %v807, 2147483648
  %v809 = vmul.f32 %v808, 1.442695
  %v810 = vpow.pop %v809
  %v811 = vadd.f32 %v810, 1.0
  %v812 = vrcp.pop %v811
  %v813 = vmul.f32 1.0, %v812
  %v814 = vmul.f32 %v813, 2.0
  %v815 = vsub.f32 %v814, 1.0
  %v816 = vmul.f32 %v813, %v640
  %818 = vrot.lane.b32.xlu0 %v815, 64
  %v819 = vpop.permute.xlu0 %818
  %v821 = vmul.f32 %v813, %v819
  %823 = vrot.lane.b32.xlu0 %v821, 32
  %v824 = vpop.permute.xlu0 %823
  %v826 = vadd.f32 %v816, %v824
  %v827 = vtanh.pop %v826
  %829 = vrot.lane.b32.xlu0 %v827, 64
  %v830 = vpop.permute.xlu0 %829
  %v832 = vmul.f32 %v813, %v830
  %v833 = vpack.c.bf16 %v832, %v832
  %v834 = vpack.c.bf16 %v766, %v766
  %836 = vrot.lane.b32.xlu0 %v834, 32
  %v837 = vpop.permute.xlu0 %836
  %v839 = vsel %vm84, %v837, 0
  %841 = vmatprep.subr.bf16.mxu0 0
  %842 = vmatpush1.bf16.msra.mxu0 %v261
  %843 = vmatprep.subr.bf16.mxu0 0
  %844 = vmatpush1.bf16.msra.mxu0 %v262
  %845 = vmatprep.subr.bf16.mxu0 0
  %846 = vmatpush1.bf16.msra.mxu0 0
  %847 = vmatprep.subr.bf16.mxu0 0
  %848 = vmatpush1.bf16.msra.mxu0 0
  %849 = vmatprep.subr.bf16.mxu0 0
  %850 = vmatpush1.bf16.msra.mxu0 0
  %851 = vmatprep.subr.bf16.mxu0 0
  %852 = vmatpush1.bf16.msra.mxu0 0
  %853 = vmatprep.subr.bf16.mxu0 0
  %854 = vmatpush1.bf16.msra.mxu0 0
  %855 = vmatprep.subr.bf16.mxu0 0
  %856 = vmatpush1.bf16.msra.mxu0 0
  %857 = vmatprep.subr.bf16.mxu0 0
  %858 = vmatpush1.bf16.msra.mxu0 0
  %859 = vmatprep.subr.bf16.mxu0 0
  %860 = vmatpush1.bf16.msra.mxu0 0
  %861 = vmatprep.subr.bf16.mxu0 0
  %862 = vmatpush1.bf16.msra.mxu0 0
  %863 = vmatprep.subr.bf16.mxu0 0
  %864 = vmatpush1.bf16.msra.mxu0 0
  %865 = vmatprep.subr.bf16.mxu0 0
  %866 = vmatpush1.bf16.msra.mxu0 0
  %867 = vmatprep.subr.bf16.mxu0 0
  %868 = vmatpush1.bf16.msra.mxu0 0
  %869 = vmatprep.subr.bf16.mxu0 0
  %870 = vmatpush1.bf16.msra.mxu0 0
  %871 = vmatprep.subr.bf16.mxu0 0
  %872 = vmatpush1.bf16.msra.mxu0 0
  %873 = vmatprep.mubr.bf16.mxu0 0
  %874 = vmatmul.mubr.bf16.gmra.mrb[0].mxu0 %v839
  %v875 = vpop.f32.mrb[0].mxu0
  %v876 = vadd.f32 0.0, %v875
  %v877 = vpop.f32.mrb[0].mxu0
  %v878 = vpop.f32.mrb[0].mxu0
  %v879 = vpop.f32.mrb[0].mxu0
  %880 = vdwg.mxu0
  %882 = vrot.lane.b32.xlu0 %v833, 32
  %v883 = vpop.permute.xlu0 %882
  %v885 = vsel %vm84, %v883, 0
  %887 = vmatprep.subr.bf16.mxu0 0
  %888 = vmatpush1.bf16.msra.mxu0 %v319
  %889 = vmatprep.subr.bf16.mxu0 0
  %890 = vmatpush1.bf16.msra.mxu0 %v320
  %891 = vmatprep.subr.bf16.mxu0 0
  %892 = vmatpush1.bf16.msra.mxu0 0
  %893 = vmatprep.subr.bf16.mxu0 0
  %894 = vmatpush1.bf16.msra.mxu0 0
  %895 = vmatprep.subr.bf16.mxu0 0
  %896 = vmatpush1.bf16.msra.mxu0 0
  %897 = vmatprep.subr.bf16.mxu0 0
  %898 = vmatpush1.bf16.msra.mxu0 0
  %899 = vmatprep.subr.bf16.mxu0 0
  %900 = vmatpush1.bf16.msra.mxu0 0
  %901 = vmatprep.subr.bf16.mxu0 0
  %902 = vmatpush1.bf16.msra.mxu0 0
  %903 = vmatprep.subr.bf16.mxu0 0
  %904 = vmatpush1.bf16.msra.mxu0 0
  %905 = vmatprep.subr.bf16.mxu0 0
  %906 = vmatpush1.bf16.msra.mxu0 0
  %907 = vmatprep.subr.bf16.mxu0 0
  %908 = vmatpush1.bf16.msra.mxu0 0
  %909 = vmatprep.subr.bf16.mxu0 0
  %910 = vmatpush1.bf16.msra.mxu0 0
  %911 = vmatprep.subr.bf16.mxu0 0
  %912 = vmatpush1.bf16.msra.mxu0 0
  %913 = vmatprep.subr.bf16.mxu0 0
  %914 = vmatpush1.bf16.msra.mxu0 0
  %915 = vmatprep.subr.bf16.mxu0 0
  %916 = vmatpush1.bf16.msra.mxu0 0
  %917 = vmatprep.subr.bf16.mxu0 0
  %918 = vmatpush1.bf16.msra.mxu0 0
  %919 = vmatprep.mubr.bf16.mxu0 0
  %920 = vmatmul.mubr.bf16.gmra.mrb[0].mxu0 %v885
  %v921 = vpop.f32.mrb[0].mxu0
  %v922 = vadd.f32 %v876, %v921
  %v923 = vpop.f32.mrb[0].mxu0
  %v924 = vpop.f32.mrb[0].mxu0
  %v925 = vpop.f32.mrb[0].mxu0
  %926 = vdwg.mxu0
  %v927 = vadd.f32 %v922, %v39
  %v928 = vxor.u32 %v927, 2147483648
  %v929 = vmul.f32 %v928, 1.442695
  %v930 = vpow.pop %v929
  %v931 = vadd.f32 %v930, 1.0
  %v932 = vrcp.pop %v931
  %v933 = vmul.f32 1.0, %v932
  %v934 = vmul.f32 %v933, 2.0
  %v935 = vsub.f32 %v934, 1.0
  %v936 = vmul.f32 %v933, %v760
  %938 = vrot.lane.b32.xlu0 %v935, 64
  %v939 = vpop.permute.xlu0 %938
  %v941 = vmul.f32 %v933, %v939
  %943 = vrot.lane.b32.xlu0 %v941, 32
  %v944 = vpop.permute.xlu0 %943
  %v946 = vadd.f32 %v936, %v944
  %v947 = vtanh.pop %v946
  %949 = vrot.lane.b32.xlu0 %v947, 64
  %v950 = vpop.permute.xlu0 %949
  %v952 = vmul.f32 %v933, %v950
  %953 = vmatprep.subr.bf16.mxu0 0
  %954 = vmatpush1.bf16.msra.mxu0 %v172
  %955 = vmatprep.subr.bf16.mxu0 0
  %956 = vmatpush1.bf16.msra.mxu0 %v173
  %957 = vmatprep.subr.bf16.mxu0 0
  %958 = vmatpush1.bf16.msra.mxu0 0
  %959 = vmatprep.subr.bf16.mxu0 0
  %960 = vmatpush1.bf16.msra.mxu0 0
  %961 = vmatprep.subr.bf16.mxu0 0
  %962 = vmatpush1.bf16.msra.mxu0 0
  %963 = vmatprep.subr.bf16.mxu0 0
  %964 = vmatpush1.bf16.msra.mxu0 0
  %965 = vmatprep.subr.bf16.mxu0 0
  %966 = vmatpush1.bf16.msra.mxu0 0
  %967 = vmatprep.subr.bf16.mxu0 0
  %968 = vmatpush1.bf16.msra.mxu0 0
  %969 = vmatprep.subr.bf16.mxu0 0
  %970 = vmatpush1.bf16.msra.mxu0 0
  %971 = vmatprep.subr.bf16.mxu0 0
  %972 = vmatpush1.bf16.msra.mxu0 0
  %973 = vmatprep.subr.bf16.mxu0 0
  %974 = vmatpush1.bf16.msra.mxu0 0
  %975 = vmatprep.subr.bf16.mxu0 0
  %976 = vmatpush1.bf16.msra.mxu0 0
  %977 = vmatprep.subr.bf16.mxu0 0
  %978 = vmatpush1.bf16.msra.mxu0 0
  %979 = vmatprep.subr.bf16.mxu0 0
  %980 = vmatpush1.bf16.msra.mxu0 0
  %981 = vmatprep.subr.bf16.mxu0 0
  %982 = vmatpush1.bf16.msra.mxu0 0
  %983 = vmatprep.subr.bf16.mxu0 0
  %984 = vmatpush1.bf16.msra.mxu0 0
  %985 = vmatprep.mubr.bf16.mxu0 0
  %986 = vmatmul.mubr.bf16.gmra.mrb[0].mxu0 %v885
  %v987 = vpop.f32.mrb[0].mxu0
  %v988 = vadd.f32 0.0, %v987
  %v989 = vpop.f32.mrb[0].mxu0
  %v990 = vpop.f32.mrb[0].mxu0
  %v991 = vpop.f32.mrb[0].mxu0
  %992 = vdwg.mxu0
  %v993 = vadd.f32 %v148, %v988
  %v994 = vxor.u32 %v993, 2147483648
  %v995 = vmul.f32 %v994, 1.442695
  %v996 = vpow.pop %v995
  %v997 = vadd.f32 %v996, 1.0
  %v998 = vrcp.pop %v997
  %v999 = vmul.f32 1.0, %v998
  %v1000 = vmul.f32 %v999, 2.0
  %v1001 = vsub.f32 %v1000, 1.0
  %v1002 = vmul.f32 %v999, %v826
  %1004 = vrot.lane.b32.xlu0 %v1001, 64
  %v1005 = vpop.permute.xlu0 %1004
  %v1007 = vmul.f32 %v999, %v1005
  %1009 = vrot.lane.b32.xlu0 %v1007, 32
  %v1010 = vpop.permute.xlu0 %1009
  %v1012 = vadd.f32 %v1002, %v1010
  %v1013 = vtanh.pop %v1012
  %1015 = vrot.lane.b32.xlu0 %v1013, 64
  %v1016 = vpop.permute.xlu0 %1015
  %v1018 = vmul.f32 %v999, %v1016
  %v1019 = vpack.c.bf16 %v1018, %v1018
  %v1020 = vpack.c.bf16 %v952, %v952
  %1022 = vrot.lane.b32.xlu0 %v1020, 32
  %v1023 = vpop.permute.xlu0 %1022
  %v1025 = vsel %vm84, %v1023, 0
  %1027 = vmatprep.subr.bf16.mxu0 0
  %1028 = vmatpush1.bf16.msra.mxu0 %v261
  %1029 = vmatprep.subr.bf16.mxu0 0
  %1030 = vmatpush1.bf16.msra.mxu0 %v262
  %1031 = vmatprep.subr.bf16.mxu0 0
  %1032 = vmatpush1.bf16.msra.mxu0 0
  %1033 = vmatprep.subr.bf16.mxu0 0
  %1034 = vmatpush1.bf16.msra.mxu0 0
  %1035 = vmatprep.subr.bf16.mxu0 0
  %1036 = vmatpush1.bf16.msra.mxu0 0
  %1037 = vmatprep.subr.bf16.mxu0 0
  %1038 = vmatpush1.bf16.msra.mxu0 0
  %1039 = vmatprep.subr.bf16.mxu0 0
  %1040 = vmatpush1.bf16.msra.mxu0 0
  %1041 = vmatprep.subr.bf16.mxu0 0
  %1042 = vmatpush1.bf16.msra.mxu0 0
  %1043 = vmatprep.subr.bf16.mxu0 0
  %1044 = vmatpush1.bf16.msra.mxu0 0
  %1045 = vmatprep.subr.bf16.mxu0 0
  %1046 = vmatpush1.bf16.msra.mxu0 0
  %1047 = vmatprep.subr.bf16.mxu0 0
  %1048 = vmatpush1.bf16.msra.mxu0 0
  %1049 = vmatprep.subr.bf16.mxu0 0
  %1050 = vmatpush1.bf16.msra.mxu0 0
  %1051 = vmatprep.subr.bf16.mxu0 0
  %1052 = vmatpush1.bf16.msra.mxu0 0
  %1053 = vmatprep.subr.bf16.mxu0 0
  %1054 = vmatpush1.bf16.msra.mxu0 0
  %1055 = vmatprep.subr.bf16.mxu0 0
  %1056 = vmatpush1.bf16.msra.mxu0 0
  %1057 = vmatprep.subr.bf16.mxu0 0
  %1058 = vmatpush1.bf16.msra.mxu0 0
  %1059 = vmatprep.mubr.bf16.mxu0 0
  %1060 = vmatmul.mubr.bf16.gmra.mrb[0].mxu0 %v1025
  %v1061 = vpop.f32.mrb[0].mxu0
  %v1062 = vadd.f32 0.0, %v1061
  %v1063 = vpop.f32.mrb[0].mxu0
  %v1064 = vpop.f32.mrb[0].mxu0
  %v1065 = vpop.f32.mrb[0].mxu0
  %1066 = vdwg.mxu0
  %1068 = vrot.lane.b32.xlu0 %v1019, 32
  %v1069 = vpop.permute.xlu0 %1068
  %v1071 = vsel %vm84, %v1069, 0
  %1073 = vmatprep.subr.bf16.mxu0 0
  %1074 = vmatpush1.bf16.msra.mxu0 %v319
  %1075 = vmatprep.subr.bf16.mxu0 0
  %1076 = vmatpush1.bf16.msra.mxu0 %v320
  %1077 = vmatprep.subr.bf16.mxu0 0
  %1078 = vmatpush1.bf16.msra.mxu0 0
  %1079 = vmatprep.subr.bf16.mxu0 0
  %1080 = vmatpush1.bf16.msra.mxu0 0
  %1081 = vmatprep.subr.bf16.mxu0 0
  %1082 = vmatpush1.bf16.msra.mxu0 0
  %1083 = vmatprep.subr.bf16.mxu0 0
  %1084 = vmatpush1.bf16.msra.mxu0 0
  %1085 = vmatprep.subr.bf16.mxu0 0
  %1086 = vmatpush1.bf16.msra.mxu0 0
  %1087 = vmatprep.subr.bf16.mxu0 0
  %1088 = vmatpush1.bf16.msra.mxu0 0
  %1089 = vmatprep.subr.bf16.mxu0 0
  %1090 = vmatpush1.bf16.msra.mxu0 0
  %1091 = vmatprep.subr.bf16.mxu0 0
  %1092 = vmatpush1.bf16.msra.mxu0 0
  %1093 = vmatprep.subr.bf16.mxu0 0
  %1094 = vmatpush1.bf16.msra.mxu0 0
  %1095 = vmatprep.subr.bf16.mxu0 0
  %1096 = vmatpush1.bf16.msra.mxu0 0
  %1097 = vmatprep.subr.bf16.mxu0 0
  %1098 = vmatpush1.bf16.msra.mxu0 0
  %1099 = vmatprep.subr.bf16.mxu0 0
  %1100 = vmatpush1.bf16.msra.mxu0 0
  %1101 = vmatprep.subr.bf16.mxu0 0
  %1102 = vmatpush1.bf16.msra.mxu0 0
  %1103 = vmatprep.subr.bf16.mxu0 0
  %1104 = vmatpush1.bf16.msra.mxu0 0
  %1105 = vmatprep.mubr.bf16.mxu0 0
  %1106 = vmatmul.mubr.bf16.gmra.mrb[0].mxu0 %v1071
  %v1107 = vpop.f32.mrb[0].mxu0
  %v1108 = vadd.f32 %v1062, %v1107
  %v1109 = vpop.f32.mrb[0].mxu0
  %v1110 = vpop.f32.mrb[0].mxu0
  %v1111 = vpop.f32.mrb[0].mxu0
  %1112 = vdwg.mxu0
  %v1113 = vadd.f32 %v1108, %v39
  %v1114 = vxor.u32 %v1113, 2147483648
  %v1115 = vmul.f32 %v1114, 1.442695
  %v1116 = vpow.pop %v1115
  %v1117 = vadd.f32 %v1116, 1.0
  %v1118 = vrcp.pop %v1117
  %v1119 = vmul.f32 1.0, %v1118
  %v1120 = vmul.f32 %v1119, 2.0
  %v1121 = vsub.f32 %v1120, 1.0
  %v1122 = vmul.f32 %v1119, %v946
  %1124 = vrot.lane.b32.xlu0 %v1121, 64
  %v1125 = vpop.permute.xlu0 %1124
  %v1127 = vmul.f32 %v1119, %v1125
  %1129 = vrot.lane.b32.xlu0 %v1127, 32
  %v1130 = vpop.permute.xlu0 %1129
  %v1132 = vadd.f32 %v1122, %v1130
  %v1133 = vtanh.pop %v1132
  %1135 = vrot.lane.b32.xlu0 %v1133, 64
  %v1136 = vpop.permute.xlu0 %1135
  %v1138 = vmul.f32 %v1119, %v1136
  %1139 = vmatprep.subr.bf16.mxu0 0
  %1140 = vmatpush1.bf16.msra.mxu0 %v172
  %1141 = vmatprep.subr.bf16.mxu0 0
  %1142 = vmatpush1.bf16.msra.mxu0 %v173
  %1143 = vmatprep.subr.bf16.mxu0 0
  %1144 = vmatpush1.bf16.msra.mxu0 0
  %1145 = vmatprep.subr.bf16.mxu0 0
  %1146 = vmatpush1.bf16.msra.mxu0 0
  %1147 = vmatprep.subr.bf16.mxu0 0
  %1148 = vmatpush1.bf16.msra.mxu0 0
  %1149 = vmatprep.subr.bf16.mxu0 0
  %1150 = vmatpush1.bf16.msra.mxu0 0
  %1151 = vmatprep.subr.bf16.mxu0 0
  %1152 = vmatpush1.bf16.msra.mxu0 0
  %1153 = vmatprep.subr.bf16.mxu0 0
  %1154 = vmatpush1.bf16.msra.mxu0 0
  %1155 = vmatprep.subr.bf16.mxu0 0
  %1156 = vmatpush1.bf16.msra.mxu0 0
  %1157 = vmatprep.subr.bf16.mxu0 0
  %1158 = vmatpush1.bf16.msra.mxu0 0
  %1159 = vmatprep.subr.bf16.mxu0 0
  %1160 = vmatpush1.bf16.msra.mxu0 0
  %1161 = vmatprep.subr.bf16.mxu0 0
  %1162 = vmatpush1.bf16.msra.mxu0 0
  %1163 = vmatprep.subr.bf16.mxu0 0
  %1164 = vmatpush1.bf16.msra.mxu0 0
  %1165 = vmatprep.subr.bf16.mxu0 0
  %1166 = vmatpush1.bf16.msra.mxu0 0
  %1167 = vmatprep.subr.bf16.mxu0 0
  %1168 = vmatpush1.bf16.msra.mxu0 0
  %1169 = vmatprep.subr.bf16.mxu0 0
  %1170 = vmatpush1.bf16.msra.mxu0 0
  %1171 = vmatprep.mubr.bf16.mxu0 0
  %1172 = vmatmul.mubr.bf16.gmra.mrb[0].mxu0 %v1071
  %v1173 = vpop.f32.mrb[0].mxu0
  %v1174 = vadd.f32 0.0, %v1173
  %v1175 = vpop.f32.mrb[0].mxu0
  %v1176 = vpop.f32.mrb[0].mxu0
  %v1177 = vpop.f32.mrb[0].mxu0
  %1178 = vdwg.mxu0
  %v1179 = vadd.f32 %v151, %v1174
  %v1180 = vxor.u32 %v1179, 2147483648
  %v1181 = vmul.f32 %v1180, 1.442695
  %v1182 = vpow.pop %v1181
  %v1183 = vadd.f32 %v1182, 1.0
  %v1184 = vrcp.pop %v1183
  %v1185 = vmul.f32 1.0, %v1184
  %v1186 = vmul.f32 %v1185, 2.0
  %v1187 = vsub.f32 %v1186, 1.0
  %v1188 = vmul.f32 %v1185, %v1012
  %1190 = vrot.lane.b32.xlu0 %v1187, 64
  %v1191 = vpop.permute.xlu0 %1190
  %v1193 = vmul.f32 %v1185, %v1191
  %1195 = vrot.lane.b32.xlu0 %v1193, 32
  %v1196 = vpop.permute.xlu0 %1195
  %v1198 = vadd.f32 %v1188, %v1196
  %v1199 = vtanh.pop %v1198
  %1201 = vrot.lane.b32.xlu0 %v1199, 64
  %v1202 = vpop.permute.xlu0 %1201
  %v1204 = vmul.f32 %v1185, %v1202
  %v1205 = vpack.c.bf16 %v1204, %v1204
  %v1206 = vpack.c.bf16 %v1138, %v1138
  %1208 = vrot.lane.b32.xlu0 %v1206, 32
  %v1209 = vpop.permute.xlu0 %1208
  %v1211 = vsel %vm84, %v1209, 0
  %1213 = vmatprep.subr.bf16.mxu0 0
  %1214 = vmatpush1.bf16.msra.mxu0 %v261
  %1215 = vmatprep.subr.bf16.mxu0 0
  %1216 = vmatpush1.bf16.msra.mxu0 %v262
  %1217 = vmatprep.subr.bf16.mxu0 0
  %1218 = vmatpush1.bf16.msra.mxu0 0
  %1219 = vmatprep.subr.bf16.mxu0 0
  %1220 = vmatpush1.bf16.msra.mxu0 0
  %1221 = vmatprep.subr.bf16.mxu0 0
  %1222 = vmatpush1.bf16.msra.mxu0 0
  %1223 = vmatprep.subr.bf16.mxu0 0
  %1224 = vmatpush1.bf16.msra.mxu0 0
  %1225 = vmatprep.subr.bf16.mxu0 0
  %1226 = vmatpush1.bf16.msra.mxu0 0
  %1227 = vmatprep.subr.bf16.mxu0 0
  %1228 = vmatpush1.bf16.msra.mxu0 0
  %1229 = vmatprep.subr.bf16.mxu0 0
  %1230 = vmatpush1.bf16.msra.mxu0 0
  %1231 = vmatprep.subr.bf16.mxu0 0
  %1232 = vmatpush1.bf16.msra.mxu0 0
  %1233 = vmatprep.subr.bf16.mxu0 0
  %1234 = vmatpush1.bf16.msra.mxu0 0
  %1235 = vmatprep.subr.bf16.mxu0 0
  %1236 = vmatpush1.bf16.msra.mxu0 0
  %1237 = vmatprep.subr.bf16.mxu0 0
  %1238 = vmatpush1.bf16.msra.mxu0 0
  %1239 = vmatprep.subr.bf16.mxu0 0
  %1240 = vmatpush1.bf16.msra.mxu0 0
  %1241 = vmatprep.subr.bf16.mxu0 0
  %1242 = vmatpush1.bf16.msra.mxu0 0
  %1243 = vmatprep.subr.bf16.mxu0 0
  %1244 = vmatpush1.bf16.msra.mxu0 0
  %1245 = vmatprep.mubr.bf16.mxu0 0
  %1246 = vmatmul.mubr.bf16.gmra.mrb[0].mxu0 %v1211
  %v1247 = vpop.f32.mrb[0].mxu0
  %v1248 = vadd.f32 0.0, %v1247
  %v1249 = vpop.f32.mrb[0].mxu0
  %v1250 = vpop.f32.mrb[0].mxu0
  %v1251 = vpop.f32.mrb[0].mxu0
  %1252 = vdwg.mxu0
  %1254 = vrot.lane.b32.xlu0 %v1205, 32
  %v1255 = vpop.permute.xlu0 %1254
  %v1257 = vsel %vm84, %v1255, 0
  %1259 = vmatprep.subr.bf16.mxu0 0
  %1260 = vmatpush1.bf16.msra.mxu0 %v319
  %1261 = vmatprep.subr.bf16.mxu0 0
  %1262 = vmatpush1.bf16.msra.mxu0 %v320
  %1263 = vmatprep.subr.bf16.mxu0 0
  %1264 = vmatpush1.bf16.msra.mxu0 0
  %1265 = vmatprep.subr.bf16.mxu0 0
  %1266 = vmatpush1.bf16.msra.mxu0 0
  %1267 = vmatprep.subr.bf16.mxu0 0
  %1268 = vmatpush1.bf16.msra.mxu0 0
  %1269 = vmatprep.subr.bf16.mxu0 0
  %1270 = vmatpush1.bf16.msra.mxu0 0
  %1271 = vmatprep.subr.bf16.mxu0 0
  %1272 = vmatpush1.bf16.msra.mxu0 0
  %1273 = vmatprep.subr.bf16.mxu0 0
  %1274 = vmatpush1.bf16.msra.mxu0 0
  %1275 = vmatprep.subr.bf16.mxu0 0
  %1276 = vmatpush1.bf16.msra.mxu0 0
  %1277 = vmatprep.subr.bf16.mxu0 0
  %1278 = vmatpush1.bf16.msra.mxu0 0
  %1279 = vmatprep.subr.bf16.mxu0 0
  %1280 = vmatpush1.bf16.msra.mxu0 0
  %1281 = vmatprep.subr.bf16.mxu0 0
  %1282 = vmatpush1.bf16.msra.mxu0 0
  %1283 = vmatprep.subr.bf16.mxu0 0
  %1284 = vmatpush1.bf16.msra.mxu0 0
  %1285 = vmatprep.subr.bf16.mxu0 0
  %1286 = vmatpush1.bf16.msra.mxu0 0
  %1287 = vmatprep.subr.bf16.mxu0 0
  %1288 = vmatpush1.bf16.msra.mxu0 0
  %1289 = vmatprep.subr.bf16.mxu0 0
  %1290 = vmatpush1.bf16.msra.mxu0 0
  %1291 = vmatprep.mubr.bf16.mxu0 0
  %1292 = vmatmul.mubr.bf16.gmra.mrb[0].mxu0 %v1257
  %v1293 = vpop.f32.mrb[0].mxu0
  %v1294 = vadd.f32 %v1248, %v1293
  %v1295 = vpop.f32.mrb[0].mxu0
  %v1296 = vpop.f32.mrb[0].mxu0
  %v1297 = vpop.f32.mrb[0].mxu0
  %1298 = vdwg.mxu0
  %v1299 = vadd.f32 %v1294, %v39
  %v1300 = vxor.u32 %v1299, 2147483648
  %v1301 = vmul.f32 %v1300, 1.442695
  %v1302 = vpow.pop %v1301
  %v1303 = vadd.f32 %v1302, 1.0
  %v1304 = vrcp.pop %v1303
  %v1305 = vmul.f32 1.0, %v1304
  %v1306 = vmul.f32 %v1305, 2.0
  %v1307 = vsub.f32 %v1306, 1.0
  %v1308 = vmul.f32 %v1305, %v1132
  %1310 = vrot.lane.b32.xlu0 %v1307, 64
  %v1311 = vpop.permute.xlu0 %1310
  %v1313 = vmul.f32 %v1305, %v1311
  %1315 = vrot.lane.b32.xlu0 %v1313, 32
  %v1316 = vpop.permute.xlu0 %1315
  %v1318 = vadd.f32 %v1308, %v1316
  %v1319 = vtanh.pop %v1318
  %1321 = vrot.lane.b32.xlu0 %v1319, 64
  %v1322 = vpop.permute.xlu0 %1321
  %v1324 = vmul.f32 %v1305, %v1322
  %1325 = vmatprep.subr.bf16.mxu0 0
  %1326 = vmatpush1.bf16.msra.mxu0 %v172
  %1327 = vmatprep.subr.bf16.mxu0 0
  %1328 = vmatpush1.bf16.msra.mxu0 %v173
  %1329 = vmatprep.subr.bf16.mxu0 0
  %1330 = vmatpush1.bf16.msra.mxu0 0
  %1331 = vmatprep.subr.bf16.mxu0 0
  %1332 = vmatpush1.bf16.msra.mxu0 0
  %1333 = vmatprep.subr.bf16.mxu0 0
  %1334 = vmatpush1.bf16.msra.mxu0 0
  %1335 = vmatprep.subr.bf16.mxu0 0
  %1336 = vmatpush1.bf16.msra.mxu0 0
  %1337 = vmatprep.subr.bf16.mxu0 0
  %1338 = vmatpush1.bf16.msra.mxu0 0
  %1339 = vmatprep.subr.bf16.mxu0 0
  %1340 = vmatpush1.bf16.msra.mxu0 0
  %1341 = vmatprep.subr.bf16.mxu0 0
  %1342 = vmatpush1.bf16.msra.mxu0 0
  %1343 = vmatprep.subr.bf16.mxu0 0
  %1344 = vmatpush1.bf16.msra.mxu0 0
  %1345 = vmatprep.subr.bf16.mxu0 0
  %1346 = vmatpush1.bf16.msra.mxu0 0
  %1347 = vmatprep.subr.bf16.mxu0 0
  %1348 = vmatpush1.bf16.msra.mxu0 0
  %1349 = vmatprep.subr.bf16.mxu0 0
  %1350 = vmatpush1.bf16.msra.mxu0 0
  %1351 = vmatprep.subr.bf16.mxu0 0
  %1352 = vmatpush1.bf16.msra.mxu0 0
  %1353 = vmatprep.subr.bf16.mxu0 0
  %1354 = vmatpush1.bf16.msra.mxu0 0
  %1355 = vmatprep.subr.bf16.mxu0 0
  %1356 = vmatpush1.bf16.msra.mxu0 0
  %1357 = vmatprep.mubr.bf16.mxu0 0
  %1358 = vmatmul.mubr.bf16.gmra.mrb[0].mxu0 %v1257
  %v1359 = vpop.f32.mrb[0].mxu0
  %v1360 = vadd.f32 0.0, %v1359
  %v1361 = vpop.f32.mrb[0].mxu0
  %v1362 = vpop.f32.mrb[0].mxu0
  %v1363 = vpop.f32.mrb[0].mxu0
  %1364 = vdwg.mxu0
  %v1365 = vadd.f32 %v156, %v1360
  %v1366 = vxor.u32 %v1365, 2147483648
  %v1367 = vmul.f32 %v1366, 1.442695
  %v1368 = vpow.pop %v1367
  %v1369 = vadd.f32 %v1368, 1.0
  %v1370 = vrcp.pop %v1369
  %v1371 = vmul.f32 1.0, %v1370
  %v1372 = vmul.f32 %v1371, 2.0
  %v1373 = vsub.f32 %v1372, 1.0
  %v1374 = vmul.f32 %v1371, %v1198
  %1376 = vrot.lane.b32.xlu0 %v1373, 64
  %v1377 = vpop.permute.xlu0 %1376
  %v1379 = vmul.f32 %v1371, %v1377
  %1381 = vrot.lane.b32.xlu0 %v1379, 32
  %v1382 = vpop.permute.xlu0 %1381
  %v1384 = vadd.f32 %v1374, %v1382
  %v1385 = vtanh.pop %v1384
  %1387 = vrot.lane.b32.xlu0 %v1385, 64
  %v1388 = vpop.permute.xlu0 %1387
  %v1390 = vmul.f32 %v1371, %v1388
  %v1391 = vpack.c.bf16 %v1390, %v1390
  %v1392 = vpack.c.bf16 %v1324, %v1324
  %1394 = vrot.lane.b32.xlu0 %v1392, 32
  %v1395 = vpop.permute.xlu0 %1394
  %v1397 = vsel %vm84, %v1395, 0
  %1399 = vmatprep.subr.bf16.mxu0 0
  %1400 = vmatpush1.bf16.msra.mxu0 %v261
  %1401 = vmatprep.subr.bf16.mxu0 0
  %1402 = vmatpush1.bf16.msra.mxu0 %v262
  %1403 = vmatprep.subr.bf16.mxu0 0
  %1404 = vmatpush1.bf16.msra.mxu0 0
  %1405 = vmatprep.subr.bf16.mxu0 0
  %1406 = vmatpush1.bf16.msra.mxu0 0
  %1407 = vmatprep.subr.bf16.mxu0 0
  %1408 = vmatpush1.bf16.msra.mxu0 0
  %1409 = vmatprep.subr.bf16.mxu0 0
  %1410 = vmatpush1.bf16.msra.mxu0 0
  %1411 = vmatprep.subr.bf16.mxu0 0
  %1412 = vmatpush1.bf16.msra.mxu0 0
  %1413 = vmatprep.subr.bf16.mxu0 0
  %1414 = vmatpush1.bf16.msra.mxu0 0
  %1415 = vmatprep.subr.bf16.mxu0 0
  %1416 = vmatpush1.bf16.msra.mxu0 0
  %1417 = vmatprep.subr.bf16.mxu0 0
  %1418 = vmatpush1.bf16.msra.mxu0 0
  %1419 = vmatprep.subr.bf16.mxu0 0
  %1420 = vmatpush1.bf16.msra.mxu0 0
  %1421 = vmatprep.subr.bf16.mxu0 0
  %1422 = vmatpush1.bf16.msra.mxu0 0
  %1423 = vmatprep.subr.bf16.mxu0 0
  %1424 = vmatpush1.bf16.msra.mxu0 0
  %1425 = vmatprep.subr.bf16.mxu0 0
  %1426 = vmatpush1.bf16.msra.mxu0 0
  %1427 = vmatprep.subr.bf16.mxu0 0
  %1428 = vmatpush1.bf16.msra.mxu0 0
  %1429 = vmatprep.subr.bf16.mxu0 0
  %1430 = vmatpush1.bf16.msra.mxu0 0
  %1431 = vmatprep.mubr.bf16.mxu0 0
  %1432 = vmatmul.mubr.bf16.gmra.mrb[0].mxu0 %v1397
  %v1433 = vpop.f32.mrb[0].mxu0
  %v1434 = vadd.f32 0.0, %v1433
  %v1435 = vpop.f32.mrb[0].mxu0
  %v1436 = vpop.f32.mrb[0].mxu0
  %v1437 = vpop.f32.mrb[0].mxu0
  %1438 = vdwg.mxu0
  %1440 = vrot.lane.b32.xlu0 %v1391, 32
  %v1441 = vpop.permute.xlu0 %1440
  %v1443 = vsel %vm84, %v1441, 0
  %1445 = vmatprep.subr.bf16.mxu0 0
  %1446 = vmatpush1.bf16.msra.mxu0 %v319
  %1447 = vmatprep.subr.bf16.mxu0 0
  %1448 = vmatpush1.bf16.msra.mxu0 %v320
  %1449 = vmatprep.subr.bf16.mxu0 0
  %1450 = vmatpush1.bf16.msra.mxu0 0
  %1451 = vmatprep.subr.bf16.mxu0 0
  %1452 = vmatpush1.bf16.msra.mxu0 0
  %1453 = vmatprep.subr.bf16.mxu0 0
  %1454 = vmatpush1.bf16.msra.mxu0 0
  %1455 = vmatprep.subr.bf16.mxu0 0
  %1456 = vmatpush1.bf16.msra.mxu0 0
  %1457 = vmatprep.subr.bf16.mxu0 0
  %1458 = vmatpush1.bf16.msra.mxu0 0
  %1459 = vmatprep.subr.bf16.mxu0 0
  %1460 = vmatpush1.bf16.msra.mxu0 0
  %1461 = vmatprep.subr.bf16.mxu0 0
  %1462 = vmatpush1.bf16.msra.mxu0 0
  %1463 = vmatprep.subr.bf16.mxu0 0
  %1464 = vmatpush1.bf16.msra.mxu0 0
  %1465 = vmatprep.subr.bf16.mxu0 0
  %1466 = vmatpush1.bf16.msra.mxu0 0
  %1467 = vmatprep.subr.bf16.mxu0 0
  %1468 = vmatpush1.bf16.msra.mxu0 0
  %1469 = vmatprep.subr.bf16.mxu0 0
  %1470 = vmatpush1.bf16.msra.mxu0 0
  %1471 = vmatprep.subr.bf16.mxu0 0
  %1472 = vmatpush1.bf16.msra.mxu0 0
  %1473 = vmatprep.subr.bf16.mxu0 0
  %1474 = vmatpush1.bf16.msra.mxu0 0
  %1475 = vmatprep.subr.bf16.mxu0 0
  %1476 = vmatpush1.bf16.msra.mxu0 0
  %1477 = vmatprep.mubr.bf16.mxu0 0
  %1478 = vmatmul.mubr.bf16.gmra.mrb[0].mxu0 %v1443
  %v1479 = vpop.f32.mrb[0].mxu0
  %v1480 = vadd.f32 %v1434, %v1479
  %v1481 = vpop.f32.mrb[0].mxu0
  %v1482 = vpop.f32.mrb[0].mxu0
  %v1483 = vpop.f32.mrb[0].mxu0
  %1484 = vdwg.mxu0
  %v1485 = vadd.f32 %v1480, %v39
  %v1486 = vxor.u32 %v1485, 2147483648
  %v1487 = vmul.f32 %v1486, 1.442695
  %v1488 = vpow.pop %v1487
  %v1489 = vadd.f32 %v1488, 1.0
  %v1490 = vrcp.pop %v1489
  %v1491 = vmul.f32 1.0, %v1490
  %v1492 = vmul.f32 %v1491, 2.0
  %v1493 = vsub.f32 %v1492, 1.0
  %v1494 = vmul.f32 %v1491, %v1318
  %1496 = vrot.lane.b32.xlu0 %v1493, 64
  %v1497 = vpop.permute.xlu0 %1496
  %v1499 = vmul.f32 %v1491, %v1497
  %1501 = vrot.lane.b32.xlu0 %v1499, 32
  %v1502 = vpop.permute.xlu0 %1501
  %v1504 = vadd.f32 %v1494, %v1502
  %v1505 = vtanh.pop %v1504
  %1507 = vrot.lane.b32.xlu0 %v1505, 64
  %v1508 = vpop.permute.xlu0 %1507
  %v1510 = vmul.f32 %v1491, %v1508
  %1511 = vmatprep.subr.bf16.mxu0 0
  %1512 = vmatpush1.bf16.msra.mxu0 %v172
  %1513 = vmatprep.subr.bf16.mxu0 0
  %1514 = vmatpush1.bf16.msra.mxu0 %v173
  %1515 = vmatprep.subr.bf16.mxu0 0
  %1516 = vmatpush1.bf16.msra.mxu0 0
  %1517 = vmatprep.subr.bf16.mxu0 0
  %1518 = vmatpush1.bf16.msra.mxu0 0
  %1519 = vmatprep.subr.bf16.mxu0 0
  %1520 = vmatpush1.bf16.msra.mxu0 0
  %1521 = vmatprep.subr.bf16.mxu0 0
  %1522 = vmatpush1.bf16.msra.mxu0 0
  %1523 = vmatprep.subr.bf16.mxu0 0
  %1524 = vmatpush1.bf16.msra.mxu0 0
  %1525 = vmatprep.subr.bf16.mxu0 0
  %1526 = vmatpush1.bf16.msra.mxu0 0
  %1527 = vmatprep.subr.bf16.mxu0 0
  %1528 = vmatpush1.bf16.msra.mxu0 0
  %1529 = vmatprep.subr.bf16.mxu0 0
  %1530 = vmatpush1.bf16.msra.mxu0 0
  %1531 = vmatprep.subr.bf16.mxu0 0
  %1532 = vmatpush1.bf16.msra.mxu0 0
  %1533 = vmatprep.subr.bf16.mxu0 0
  %1534 = vmatpush1.bf16.msra.mxu0 0
  %1535 = vmatprep.subr.bf16.mxu0 0
  %1536 = vmatpush1.bf16.msra.mxu0 0
  %1537 = vmatprep.subr.bf16.mxu0 0
  %1538 = vmatpush1.bf16.msra.mxu0 0
  %1539 = vmatprep.subr.bf16.mxu0 0
  %1540 = vmatpush1.bf16.msra.mxu0 0
  %1541 = vmatprep.subr.bf16.mxu0 0
  %1542 = vmatpush1.bf16.msra.mxu0 0
  %1543 = vmatprep.mubr.bf16.mxu0 0
  %1544 = vmatmul.mubr.bf16.gmra.mrb[0].mxu0 %v1443
  %v1545 = vpop.f32.mrb[0].mxu0
  %v1546 = vadd.f32 0.0, %v1545
  %v1547 = vpop.f32.mrb[0].mxu0
  %v1548 = vpop.f32.mrb[0].mxu0
  %v1549 = vpop.f32.mrb[0].mxu0
  %1550 = vdwg.mxu0
  %v1551 = vadd.f32 %v159, %v1546
  %v1552 = vxor.u32 %v1551, 2147483648
  %v1553 = vmul.f32 %v1552, 1.442695
  %v1554 = vpow.pop %v1553
  %v1555 = vadd.f32 %v1554, 1.0
  %v1556 = vrcp.pop %v1555
  %v1557 = vmul.f32 1.0, %v1556
  %v1558 = vmul.f32 %v1557, 2.0
  %v1559 = vsub.f32 %v1558, 1.0
  %v1560 = vmul.f32 %v1557, %v1384
  %1562 = vrot.lane.b32.xlu0 %v1559, 64
  %v1563 = vpop.permute.xlu0 %1562
  %v1565 = vmul.f32 %v1557, %v1563
  %1567 = vrot.lane.b32.xlu0 %v1565, 32
  %v1568 = vpop.permute.xlu0 %1567
  %v1570 = vadd.f32 %v1560, %v1568
  %v1571 = vtanh.pop %v1570
  %1573 = vrot.lane.b32.xlu0 %v1571, 64
  %v1574 = vpop.permute.xlu0 %1573
  %v1576 = vmul.f32 %v1557, %v1574
  %v1577 = vpack.c.bf16 %v1576, %v1576
  %v1578 = vpack.c.bf16 %v1510, %v1510
  %1580 = vrot.lane.b32.xlu0 %v1578, 32
  %v1581 = vpop.permute.xlu0 %1580
  %v1583 = vsel %vm84, %v1581, 0
  %1585 = vmatprep.subr.bf16.mxu0 0
  %1586 = vmatpush1.bf16.msra.mxu0 %v261
  %1587 = vmatprep.subr.bf16.mxu0 0
  %1588 = vmatpush1.bf16.msra.mxu0 %v262
  %1589 = vmatprep.subr.bf16.mxu0 0
  %1590 = vmatpush1.bf16.msra.mxu0 0
  %1591 = vmatprep.subr.bf16.mxu0 0
  %1592 = vmatpush1.bf16.msra.mxu0 0
  %1593 = vmatprep.subr.bf16.mxu0 0
  %1594 = vmatpush1.bf16.msra.mxu0 0
  %1595 = vmatprep.subr.bf16.mxu0 0
  %1596 = vmatpush1.bf16.msra.mxu0 0
  %1597 = vmatprep.subr.bf16.mxu0 0
  %1598 = vmatpush1.bf16.msra.mxu0 0
  %1599 = vmatprep.subr.bf16.mxu0 0
  %1600 = vmatpush1.bf16.msra.mxu0 0
  %1601 = vmatprep.subr.bf16.mxu0 0
  %1602 = vmatpush1.bf16.msra.mxu0 0
  %1603 = vmatprep.subr.bf16.mxu0 0
  %1604 = vmatpush1.bf16.msra.mxu0 0
  %1605 = vmatprep.subr.bf16.mxu0 0
  %1606 = vmatpush1.bf16.msra.mxu0 0
  %1607 = vmatprep.subr.bf16.mxu0 0
  %1608 = vmatpush1.bf16.msra.mxu0 0
  %1609 = vmatprep.subr.bf16.mxu0 0
  %1610 = vmatpush1.bf16.msra.mxu0 0
  %1611 = vmatprep.subr.bf16.mxu0 0
  %1612 = vmatpush1.bf16.msra.mxu0 0
  %1613 = vmatprep.subr.bf16.mxu0 0
  %1614 = vmatpush1.bf16.msra.mxu0 0
  %1615 = vmatprep.subr.bf16.mxu0 0
  %1616 = vmatpush1.bf16.msra.mxu0 0
  %1617 = vmatprep.mubr.bf16.mxu0 0
  %1618 = vmatmul.mubr.bf16.gmra.mrb[0].mxu0 %v1583
  %v1619 = vpop.f32.mrb[0].mxu0
  %v1620 = vadd.f32 0.0, %v1619
  %v1621 = vpop.f32.mrb[0].mxu0
  %v1622 = vpop.f32.mrb[0].mxu0
  %v1623 = vpop.f32.mrb[0].mxu0
  %1624 = vdwg.mxu0
  %1626 = vrot.lane.b32.xlu0 %v1577, 32
  %v1627 = vpop.permute.xlu0 %1626
  %v1629 = vsel %vm84, %v1627, 0
  %1631 = vmatprep.subr.bf16.mxu0 0
  %1632 = vmatpush1.bf16.msra.mxu0 %v319
  %1633 = vmatprep.subr.bf16.mxu0 0
  %1634 = vmatpush1.bf16.msra.mxu0 %v320
  %1635 = vmatprep.subr.bf16.mxu0 0
  %1636 = vmatpush1.bf16.msra.mxu0 0
  %1637 = vmatprep.subr.bf16.mxu0 0
  %1638 = vmatpush1.bf16.msra.mxu0 0
  %1639 = vmatprep.subr.bf16.mxu0 0
  %1640 = vmatpush1.bf16.msra.mxu0 0
  %1641 = vmatprep.subr.bf16.mxu0 0
  %1642 = vmatpush1.bf16.msra.mxu0 0
  %1643 = vmatprep.subr.bf16.mxu0 0
  %1644 = vmatpush1.bf16.msra.mxu0 0
  %1645 = vmatprep.subr.bf16.mxu0 0
  %1646 = vmatpush1.bf16.msra.mxu0 0
  %1647 = vmatprep.subr.bf16.mxu0 0
  %1648 = vmatpush1.bf16.msra.mxu0 0
  %1649 = vmatprep.subr.bf16.mxu0 0
  %1650 = vmatpush1.bf16.msra.mxu0 0
  %1651 = vmatprep.subr.bf16.mxu0 0
  %1652 = vmatpush1.bf16.msra.mxu0 0
  %1653 = vmatprep.subr.bf16.mxu0 0
  %1654 = vmatpush1.bf16.msra.mxu0 0
  %1655 = vmatprep.subr.bf16.mxu0 0
  %1656 = vmatpush1.bf16.msra.mxu0 0
  %1657 = vmatprep.subr.bf16.mxu0 0
  %1658 = vmatpush1.bf16.msra.mxu0 0
  %1659 = vmatprep.subr.bf16.mxu0 0
  %1660 = vmatpush1.bf16.msra.mxu0 0
  %1661 = vmatprep.subr.bf16.mxu0 0
  %1662 = vmatpush1.bf16.msra.mxu0 0
  %1663 = vmatprep.mubr.bf16.mxu0 0
  %1664 = vmatmul.mubr.bf16.gmra.mrb[0].mxu0 %v1629
  %v1665 = vpop.f32.mrb[0].mxu0
  %v1666 = vadd.f32 %v1620, %v1665
  %v1667 = vpop.f32.mrb[0].mxu0
  %v1668 = vpop.f32.mrb[0].mxu0
  %v1669 = vpop.f32.mrb[0].mxu0
  %1670 = vdwg.mxu0
  %v1671 = vadd.f32 %v1666, %v39
  %v1672 = vxor.u32 %v1671, 2147483648
  %v1673 = vmul.f32 %v1672, 1.442695
  %v1674 = vpow.pop %v1673
  %v1675 = vadd.f32 %v1674, 1.0
  %v1676 = vrcp.pop %v1675
  %v1677 = vmul.f32 1.0, %v1676
  %v1678 = vmul.f32 %v1677, 2.0
  %v1679 = vsub.f32 %v1678, 1.0
  %v1680 = vmul.f32 %v1677, %v1504
  %1682 = vrot.lane.b32.xlu0 %v1679, 64
  %v1683 = vpop.permute.xlu0 %1682
  %v1685 = vmul.f32 %v1677, %v1683
  %1687 = vrot.lane.b32.xlu0 %v1685, 32
  %v1688 = vpop.permute.xlu0 %1687
  %v1690 = vadd.f32 %v1680, %v1688
  %v1691 = vtanh.pop %v1690
  %1693 = vrot.lane.b32.xlu0 %v1691, 64
  %v1694 = vpop.permute.xlu0 %1693
  %v1696 = vmul.f32 %v1677, %v1694
  %v1697 = vld [vmem:[%s2 + $0x2] sm:$0x1]
  %v1698 = vld [vmem:[%s2 + $0x3] sm:$0x1]
  %v1699 = vlaneseq
  %v1700 = vshrl.u32 %v1699, 7
  %v1701 = vsub.s32 0, %v1700
  %v1702 = vrot.slane %v1697, %v1701
  %1704 = vrot.lane.b32.xlu0 %v1702, 96
  %v1705 = vpop.permute.xlu0 %1704
  %v1707 = vmul.f32 %v1696, %v1705
  %1709 = vrot.lane.b32.xlu0 %v1707, 32
  %v1710 = vpop.permute.xlu0 %1709
  %v1712 = vsel %vm84, %v1710, 0.0
  %1713 = vadd.xlane.f32.xlu0 %v1712
  %v1714 = vpop.xlane.xlu0 %1713
  %v1715 = vlaneseq
  %v1716 = vshrl.u32 %v1715, 7
  %v1717 = vsub.s32 0, %v1716
  %v1718 = vrot.slane %v1698, %v1717
  %v1719 = vadd.f32 %v1714, %v1718
  %v1720 = vxor.u32 %v1719, 2147483648
  %v1721 = vmul.f32 %v1720, 1.442695
  %v1722 = vpow.pop %v1721
  %v1723 = vadd.f32 %v1722, 1.0
  %v1724 = vrcp.pop %v1723
  %v1725 = vmul.f32 1.0, %v1724
  %1727 = vrot.lane.b32.xlu0 %v1576, 32
  %v1728 = vpop.permute.xlu0 %1727
  %1731 = vrot.lane.b32.xlu0 %v1696, 64
  %v1732 = vpop.permute.xlu0 %1731
  %1735 = vrot.lane.b32.xlu0 %v1570, 32
  %v1736 = vpop.permute.xlu0 %1735
  %1739 = vrot.lane.b32.xlu0 %v1690, 64
  %v1740 = vpop.permute.xlu0 %1739
  %v1742 = vsel %vm84, %v1728, %v1732
  %vm1743 = vcmask 523264
  %v1744 = vsel %vm1743, %v1742, %v1736
  %vm1745 = vcmask 785408
  %v1746 = vsel %vm1745, %v1744, %v1740
  %1747 = vst [vmem:[%s4] sm:$0xff] %v1746
  %1749 = vset.pattern.permute.xlu0 0
  %1750 = vperm.xlu0 %1749, %v1725
  %v1751 = vpop.permute.xlu0 %1750
  %1753 = vst [vmem:[%s4 + $0x8] sm:$0xff] %v1751
  // Predicated region
  $region18: #{sentiment_lstm_forward.1} parent=0 // pred_check
    _
  $region19: #{sentiment_lstm_forward.1} parent=0 // pred_check_branch
    %1755 = sbr.rel (0) target = $region21
  $region20: #{sentiment_lstm_forward.1} parent=0 // pred_region
    _
  $region21: #{sentiment_lstm_forward.1} parent=0 // pred_fallthru
    _
  // Predicated region
  $region22: #{sentiment_lstm_forward.1} parent=0 // pred_check
    _
  $region23: #{sentiment_lstm_forward.1} parent=0 // pred_check_branch
    %1757 = sbr.rel (0) target = $region25
  $region24: #{sentiment_lstm_forward.1} parent=0 // pred_region
    _
  $region25: #{sentiment_lstm_forward.1} parent=0 // pred_fallthru
    _

</llo_original>
